<compile_context>
chip_gen: v5e
topology: v5e:2x2
jax: 0.10.0
libtpu: 0.0.40
codegen_flags: <defaults>
</compile_context>

<pallas_src>
import functools

import jax
import jax.numpy as jnp
import numpy as np
from jax.experimental import pallas as pl
from jax.experimental.pallas import tpu as pltpu


_NT = 512   # output tile width (lanes); multiple of 128


def _round_up(v, m):
    return -(-v // m) * m


def _interp_params(t_orig, n_cols, l_interp):
    """Exact per-output-column linear-interp params (align_corners=False).

    Uses int32 rational arithmetic: src = ((2i+1)*T - L) / (2L), i = j - (T - L), clamped to >= 0.
    Returns (idx0 int32 in [0, T-1], frac f32 in [0,1) with frac=0 where idx1 would clamp to idx0,
    valid bool).  Bit-identical whether traced under jit or run eagerly.
    """
    l = jnp.maximum(jnp.asarray(l_interp, dtype=jnp.int32), 1)
    t = jnp.int32(t_orig)
    j = jnp.arange(n_cols, dtype=jnp.int32)
    offset = t - l
    i = j - offset                                   # column in the interpolated signal
    i_cl = jnp.clip(i, 0, l - 1)                     # out-of-range columns are masked anyway
    den = 2 * l
    num = jnp.maximum((2 * i_cl + 1) * t - l, 0)     # src = max((i+0.5)*T/L - 0.5, 0), exactly
    idx0 = num // den
    rem = num - idx0 * den
    w = rem.astype(jnp.float32) / den.astype(jnp.float32)   # correctly-rounded, deterministic
    idx0 = jnp.minimum(idx0, t - 1)
    w = jnp.where(idx0 >= t - 1, 0.0, w)             # clamped last sample: idx1 == idx0 -> weight 1 on idx0
    valid = jnp.logical_and(i >= 0, j < t)
    return idx0, w, valid


def _time_stretch_kernel(starts_ref, x_ref, kiota_ref, params_ref, o_ref, *, win):
    """One (B_pad, _NT) output tile.

    starts_ref: SMEM (nt,)             int32  128-aligned input-window start per tile
    x_ref     : VMEM (B_pad, t_in_pad) f32    whole (padded) input, resident
    kiota_ref : VMEM (win, _NT)        f32    row-index iota, resident
    params_ref: VMEM (8, _NT)          f32    rows: 0=idx0_local, 1=valid*(1-w), 2=valid*w
    o_ref     : VMEM (B_pad, _NT)      f32
    """
    t = pl.program_id(0)
    start = pl.multiple_of(starts_ref[t], 128)
    xw = x_ref[:, pl.ds(start, win)]                 # (B_pad, win)

    p = params_ref[...]
    idx0_l = p[0:1, :]                               # (1, _NT) window-local first tap (integer-valued)
    w0 = p[1:2, :]                                   # (1, _NT) weight for tap idx0 (0 in pad region)
    w1 = p[2:3, :]                                   # (1, _NT) weight for tap idx0+1

    k = kiota_ref[...]                               # (win, _NT) row index
    m0 = k == idx0_l
    m1 = k == (idx0_l + 1.0)
    wt = jnp.where(m0, w0, jnp.where(m1, w1, 0.0))   # (win, _NT) 2-banded weight matrix

    o_ref[...] = jnp.dot(xw, wt, preferred_element_type=jnp.float32).astype(o_ref.dtype)


def time_stretch_augmentation(x, key, sample_rate=16000, min_rate=0.9, max_rate=1.1):
    """x: (B, 1, T) mono audio. Returns (y, l_interp); y.shape == x.shape. Jittable (no per-key recompile)."""
    if x.ndim != 3:
        raise ValueError(f"Expected 3D tensor, got {x.ndim}D tensor")
    if x.shape[1] != 1:
        raise ValueError(f"Expected mono audio, got {x.shape[1]} channels")

    B, _, T = x.shape
    l_max = int(T / float(min_rate)) + 2
    if 2 * l_max * T >= 2**31:
        # TODO(synk): switch the exact index arithmetic to int64 / split form for very long clips.
        raise ValueError(f"T={T} too large for exact int32 interpolation index math (~30k sample limit).")

    nt_out = pl.cdiv(T, _NT)
    t_out_pad = nt_out * _NT
    B_pad = _round_up(max(B, 1), 8)

    # Input window width: must cover one tile's source band (<= (NT-1)*scale + 2) plus 128 lanes of
    # alignment slack.  scale = T / floor(T/rate) <= max_rate / (1 - max_rate/T).
    denom = 1.0 - float(max_rate) / float(T)
    scale_ub = float(max_rate) / denom if denom > 0.5 else 2.0 * float(max_rate)
    win = _round_up(int(np.ceil((_NT - 1) * scale_ub)) + 136, 128)
    t_in_pad = max(_round_up(T, 128), win)

    # rate ~ U[min_rate, max_rate]; L = int((1/rate)*T).  Traced -> a new key does not recompile.
    rate = jax.random.uniform(key, (), jnp.float32) * (max_rate - min_rate) + min_rate
    l_interp = jnp.maximum(jnp.floor(jnp.float32(T) / rate).astype(jnp.int32), 1)

    # Exact per-output-column taps / weights (shared with the reference).
    idx0, w, valid = _interp_params(T, t_out_pad, l_interp)
    validf = valid.astype(jnp.float32)
    w0 = validf * (1.0 - w)
    w1 = validf * w

    # 128-aligned per-tile window starts (idx0 is nondecreasing -> the tile's first column is the band low).
    band_lo = idx0[::_NT]                                        # (nt_out,)
    starts = jnp.clip((band_lo // 128) * 128, 0, t_in_pad - win).astype(jnp.int32)
    idx0_local = idx0 - jnp.repeat(starts, _NT)                  # window-local tap index, in [0, win-1]

    params = jnp.zeros((8, t_out_pad), jnp.float32)
    params = params.at[0].set(idx0_local.astype(jnp.float32))
    params = params.at[1].set(w0)
    params = params.at[2].set(w1)

    kiota = jnp.broadcast_to(jnp.arange(win, dtype=jnp.float32).reshape(win, 1), (win, _NT))

    x2d = x.reshape(B, T).astype(jnp.float32)
    x2d = jnp.pad(x2d, ((0, B_pad - B), (0, t_in_pad - T)))

    grid_spec = pltpu.PrefetchScalarGridSpec(
        num_scalar_prefetch=1,
        grid=(nt_out,),
        in_specs=[
            pl.BlockSpec((B_pad, t_in_pad), lambda t, starts: (0, 0)),   # input, resident
            pl.BlockSpec((win, _NT), lambda t, starts: (0, 0)),          # row iota, resident
            pl.BlockSpec((8, _NT), lambda t, starts: (0, t)),            # per-column params
        ],
        out_specs=pl.BlockSpec((B_pad, _NT), lambda t, starts: (0, t)),
    )
    out_pad = pl.pallas_call(
        functools.partial(_time_stretch_kernel, win=win),
        out_shape=jax.ShapeDtypeStruct((B_pad, t_out_pad), jnp.float32),
        grid_spec=grid_spec,
        compiler_params=pltpu.CompilerParams(dimension_semantics=("parallel",)),
    )(starts, x2d, kiota, params)

    y = out_pad[:B, :T].reshape(B, 1, T).astype(x.dtype)
    return y, l_interp


def _reference(x, l_interp):
    """Pure-JAX reference: linear interpolate (align_corners=False) to length l_interp, then left
    zero-pad / crop back to T — same semantics as the PyTorch module."""
    B, _, T = x.shape
    x2 = x.reshape(B, T).astype(jnp.float32)
    idx0, w, valid = _interp_params(T, T, l_interp)
    idx1 = jnp.minimum(idx0 + 1, T - 1)
    g0 = jnp.take(x2, idx0, axis=1)
    g1 = jnp.take(x2, idx1, axis=1)
    out = jnp.where(valid[None, :], g0 * (1.0 - w)[None, :] + g1 * w[None, :], 0.0)
    return out.reshape(B, 1, T)


if __name__ == "__main__":
    key = jax.random.PRNGKey(0)
    k_data, k_rate1, k_rate2 = jax.random.split(key, 3)

    B, C, T = 2, 1, 1600   # 0.1 s of 16 kHz mono audio; T % 512 != 0 exercises the padding path
    x = jax.random.normal(k_data, (B, C, T), dtype=jnp.float32)

    fn = jax.jit(time_stretch_augmentation)
    for k_rate in (k_rate1, k_rate2):          # two different rates, single compilation
        y, l_interp = fn(x, k_rate)
        y = jax.block_until_ready(y)
        y_ref = _reference(x, int(l_interp))
        np.testing.assert_allclose(np.asarray(y), np.asarray(y_ref), rtol=1e-5, atol=1e-5)
        assert y.shape == (B, C, T)

    print("KERNEL_OK")
</pallas_src>

<mosaic_0001>
module attributes {stable_mosaic.version = 11 : i64} {
  func.func @_time_stretch_kernel(%arg0: i32, %arg1: memref<4xi32, #tpu.memory_space<smem>>, %arg2: memref<8x1664xf32, #tpu.memory_space<vmem>>, %arg3: memref<768x512xf32, #tpu.memory_space<vmem>>, %arg4: memref<8x512xf32, #tpu.memory_space<vmem>>, %arg5: memref<8x512xf32, #tpu.memory_space<vmem>>) attributes {dimension_semantics = [#tpu.dimension_semantics<parallel>], iteration_bounds = array<i64: 4>, scalar_prefetch = 1 : i64, scratch_operands = 0 : i64, tpu.core_type = #tpu.core_type<tc>, window_params = [{pipeline_mode = #tpu.pipeline_mode<synchronous>, transform_indices = @transform_0, window_bounds = array<i64: 8, 1664>}, {pipeline_mode = #tpu.pipeline_mode<synchronous>, transform_indices = @transform_1, window_bounds = array<i64: 768, 512>}, {transform_indices = @transform_2, window_bounds = array<i64: 8, 512>}, {transform_indices = @transform_3, window_bounds = array<i64: 8, 512>}]} {
    %0 = arith.index_cast %arg0 : i32 to index
    %1 = memref.load %arg1[%0] : memref<4xi32, #tpu.memory_space<smem>>
    %2 = tpu.assume_multiple %1, 128 : i32
    %c0 = arith.constant 0 : index
    %3 = arith.index_cast %2 : i32 to index
    %4 = vector.load %arg2[%c0, %3] : memref<8x1664xf32, #tpu.memory_space<vmem>>, vector<8x768xf32>
    %c0_0 = arith.constant 0 : index
    %c0_1 = arith.constant 0 : index
    %5 = vector.load %arg4[%c0_0, %c0_1] : memref<8x512xf32, #tpu.memory_space<vmem>>, vector<8x512xf32>
    %6 = vector.extract_strided_slice %5 {offsets = [0, 0], sizes = [1, 512], strides = [1, 1]} : vector<8x512xf32> to vector<1x512xf32>
    %7 = vector.extract_strided_slice %5 {offsets = [1, 0], sizes = [1, 512], strides = [1, 1]} : vector<8x512xf32> to vector<1x512xf32>
    %8 = vector.extract_strided_slice %5 {offsets = [2, 0], sizes = [1, 512], strides = [1, 1]} : vector<8x512xf32> to vector<1x512xf32>
    %c0_2 = arith.constant 0 : index
    %c0_3 = arith.constant 0 : index
    %9 = vector.load %arg3[%c0_2, %c0_3] : memref<768x512xf32, #tpu.memory_space<vmem>>, vector<768x512xf32>
    %10 = vector.broadcast %6 : vector<1x512xf32> to vector<768x512xf32>
    %11 = arith.cmpf oeq, %9, %10 : vector<768x512xf32>
    %cst = arith.constant 1.000000e+00 : f32
    %12 = vector.broadcast %cst : f32 to vector<1x512xf32>
    %13 = arith.addf %6, %12 : vector<1x512xf32>
    %14 = vector.broadcast %13 : vector<1x512xf32> to vector<768x512xf32>
    %15 = arith.cmpf oeq, %9, %14 : vector<768x512xf32>
    %cst_4 = arith.constant 0.000000e+00 : f32
    %16 = vector.shape_cast %8 : vector<1x512xf32> to vector<1x512xf32>
    %17 = vector.broadcast %16 : vector<1x512xf32> to vector<768x512xf32>
    %18 = vector.broadcast %cst_4 : f32 to vector<768x512xf32>
    %19 = arith.select %15, %17, %18 : vector<768x512xi1>, vector<768x512xf32>
    %20 = vector.shape_cast %7 : vector<1x512xf32> to vector<1x512xf32>
    %21 = vector.broadcast %20 : vector<1x512xf32> to vector<768x512xf32>
    %22 = arith.select %11, %21, %19 : vector<768x512xi1>, vector<768x512xf32>
    %cst_5 = arith.constant dense<0.000000e+00> : vector<8x512xf32>
    %23 = tpu.matmul %4, %22, %cst_5 {dimension_numbers = #tpu.dot_dimension_numbers<[1], [0], [0], [1], [0, 0, 1, 1], [], []>} : vector<8x768xf32>, vector<768x512xf32>, vector<8x512xf32> -> vector<8x512xf32>
    %c0_6 = arith.constant 0 : index
    %c0_7 = arith.constant 0 : index
    %24 = vector.load %arg5[%c0_6, %c0_7] : memref<8x512xf32, #tpu.memory_space<vmem>>, vector<8x512xf32>
    tpu.vector_store %arg5[%c0_6, %c0_7], %23 {strides = array<i32>} : memref<8x512xf32, #tpu.memory_space<vmem>>, vector<8x512xf32>,
    return
  }
  func.func @transform_0(%arg0: i32, %arg1: memref<4xi32, #tpu.memory_space<smem>>) -> (i32, i32) {
    %c0_i32 = arith.constant 0 : i32
    %c0_i32_0 = arith.constant 0 : i32
    %c0_i32_1 = arith.constant 0 : i32
    return %c0_i32, %c0_i32_0 : i32, i32
  }
  func.func @transform_1(%arg0: i32, %arg1: memref<4xi32, #tpu.memory_space<smem>>) -> (i32, i32) {
    %c0_i32 = arith.constant 0 : i32
    %c0_i32_0 = arith.constant 0 : i32
    %c0_i32_1 = arith.constant 0 : i32
    return %c0_i32, %c0_i32_0 : i32, i32
  }
  func.func @transform_2(%arg0: i32, %arg1: memref<4xi32, #tpu.memory_space<smem>>) -> (i32, i32) {
    %c0_i32 = arith.constant 0 : i32
    %c0_i32_0 = arith.constant 0 : i32
    return %c0_i32, %arg0 : i32, i32
  }
  func.func @transform_3(%arg0: i32, %arg1: memref<4xi32, #tpu.memory_space<smem>>) -> (i32, i32) {
    %c0_i32 = arith.constant 0 : i32
    %c0_i32_0 = arith.constant 0 : i32
    return %c0_i32, %arg0 : i32, i32
  }
}

</mosaic_0001>

<llo_original>
// kernel: time_stretch_augmentation.1
$region0: #{time_stretch_augmentation.1}
  #allocation0 [shape = 'u32[]', space=smem, size = 0x4, offset = 0x4, fixed_abs, tag = 'smem constant byte address 0x4 - core index']
  #allocation1 [shape = 'u32[72,128]{1,0:T(1,128)}', space=vmem, size = 0x9000, scoped, tag = 'internal scratch']
  #allocation2 [shape = 's32[1]{0}', space=sflag, size = 0x4, scoped, tag = 'scoped memory for time_stretch_augmentation.1']
  #allocation3 [shape = 'u8[512]{0}', space=smem, size = 0x200, scoped, tag = 'prefetched SMEM operand 0']
  %s0 = inlined_call_operand.vmem [shape: s32[4], index: 0, kind: input, shape index: {}]
  %s1 = inlined_call_operand.vmem [shape: f32[8,1664], index: 1, kind: input, shape index: {}]
  %s2 = inlined_call_operand.vmem [shape: f32[768,512], index: 2, kind: input, shape index: {}]
  %s3 = inlined_call_operand.vmem [shape: f32[8,2048], index: 3, kind: input, shape index: {}]
  %s4 = inlined_call_operand.vmem [shape: f32[8,2048], index: 4, kind: output, shape index: {}]
  %s5 = sld [smem:[#allocation0]]
  $region45: #{time_stretch_augmentation.1} parent=0
    _
  %s7 = ssub.s32 1, %s5
  %s8 = scalar_select 0, %s7, %s5
  %s10 = sshll.u32 %s0, 4
  %s11 = int_to_ptr.vmem [resolvable:$true] %s10
  %13 = dma.vmem_to_smem %s11, 16, [#allocation3], [#allocation2]
  %15 = dma.done [#allocation2], 16
  %16 = sfence
  loop: start=0, step=1, limit=6
  $region2: #{time_stretch_augmentation.1} parent=0 // loop_pre_header
    _
  $region3: #{time_stretch_augmentation.1} parent=0 // loop_header
    %s18 = sphi 0, %s22
    %p19 = scmp.ge.s32.totalorder %s18, 6
    %s26 = sphi 0, %s26
    %s28 = sphi 0, %s26
    %s29 = sphi 0, %s28
    %s43 = sphi 0, %s29
    %s47 = sphi 0, %s47
    %s49 = sphi 0, %s47
    %s50 = sphi 0, %s49
    %s64 = sphi 0, %s50
    %s70 = sphi 0, %s72
    %s73 = sphi 0, %s70
    %s74 = sphi 0, %s73
    %s90 = sphi 0, %s74
    %s96 = sphi 0, %s98
    %s99 = sphi 0, %s96
    %s100 = sphi 0, %s99
    %s116 = sphi 0, %s100
  $region4: #{time_stretch_augmentation.1} parent=0 // loop_header_branch
    %21 = sbr.rel (%p19) target = $region8
  $region5: #{time_stretch_augmentation.1} parent=0 // loop_body
    %s23 = ssub.s32 %s18, 1
    %s24 = ssub.s32 %s18, 2
    %s25 = sadd.s32 %s18, 1
    %s27 = sadd.s32 %s26, 1
    %p30 = scmp.eq.s32.totalorder %s18, 3
    %p31 = scmp.ne.s32.totalorder %s26, %s28
    %p32 = scmp.eq.s32.totalorder %s18, 0
    %p33 = por %p31, %p32
    %p34 = scmp.ne.s32.totalorder %s26, %s28
    %p35 = scmp.eq.s32.totalorder %s23, 3
    %p36 = por %p34, %p35
    %p37 = scmp.ne.s32.totalorder %s28, %s29
    %p38 = scmp.eq.s32.totalorder %s23, 0
    %p39 = por %p37, %p38
    %p40 = scmp.ne.s32.totalorder %s28, %s29
    %p41 = scmp.eq.s32.totalorder %s24, 3
    %p42 = por %p40, %p41
    %p44 = scmp.ne.s32.totalorder %s29, %s43
    %p45 = scmp.eq.s32.totalorder %s24, 0
    %p46 = por %p44, %p45
    %s48 = sadd.s32 %s47, 1
    %p51 = scmp.eq.s32.totalorder %s18, 3
    %p52 = scmp.ne.s32.totalorder %s47, %s49
    %p53 = scmp.eq.s32.totalorder %s18, 0
    %p54 = por %p52, %p53
    %p55 = scmp.ne.s32.totalorder %s47, %s49
    %p56 = scmp.eq.s32.totalorder %s23, 3
    %p57 = por %p55, %p56
    %p58 = scmp.ne.s32.totalorder %s49, %s50
    %p59 = scmp.eq.s32.totalorder %s23, 0
    %p60 = por %p58, %p59
    %p61 = scmp.ne.s32.totalorder %s49, %s50
    %p62 = scmp.eq.s32.totalorder %s24, 3
    %p63 = por %p61, %p62
    %p65 = scmp.ne.s32.totalorder %s50, %s64
    %p66 = scmp.eq.s32.totalorder %s24, 0
    %p67 = por %p65, %p66
    %s68 = ssub.s32 %s18, %s25
    %p69 = scmp.eq.s32.totalorder %s68, 0
    %s71 = sadd.s32 %s70, 1
    %s72 = scalar_select %p69, %s70, %s71
    %p75 = pneg %p69
    %p76 = scmp.eq.s32.totalorder %s18, 3
    %p77 = por %p75, %p76
    %p78 = scmp.ne.s32.totalorder %s70, %s73
    %p79 = scmp.eq.s32.totalorder %s18, 0
    %p80 = por %p78, %p79
    %p81 = scmp.ne.s32.totalorder %s70, %s73
    %p82 = scmp.eq.s32.totalorder %s23, 3
    %p83 = por %p81, %p82
    %p84 = scmp.ne.s32.totalorder %s73, %s74
    %p85 = scmp.eq.s32.totalorder %s23, 0
    %p86 = por %p84, %p85
    %p87 = scmp.ne.s32.totalorder %s73, %s74
    %p88 = scmp.eq.s32.totalorder %s24, 3
    %p89 = por %p87, %p88
    %p91 = scmp.ne.s32.totalorder %s74, %s90
    %p92 = scmp.eq.s32.totalorder %s24, 0
    %p93 = por %p91, %p92
    %s94 = ssub.s32 %s18, %s25
    %p95 = scmp.eq.s32.totalorder %s94, 0
    %s97 = sadd.s32 %s96, 1
    %s98 = scalar_select %p95, %s96, %s97
    %p101 = pneg %p95
    %p102 = scmp.eq.s32.totalorder %s18, 3
    %p103 = por %p101, %p102
    %p104 = scmp.ne.s32.totalorder %s96, %s99
    %p105 = scmp.eq.s32.totalorder %s18, 0
    %p106 = por %p104, %p105
    %p107 = scmp.ne.s32.totalorder %s96, %s99
    %p108 = scmp.eq.s32.totalorder %s23, 3
    %p109 = por %p107, %p108
    %p110 = scmp.ne.s32.totalorder %s99, %s100
    %p111 = scmp.eq.s32.totalorder %s23, 0
    %p112 = por %p110, %p111
    %p113 = scmp.ne.s32.totalorder %s99, %s100
    %p114 = scmp.eq.s32.totalorder %s24, 3
    %p115 = por %p113, %p114
    %p117 = scmp.ne.s32.totalorder %s100, %s116
    %p118 = scmp.eq.s32.totalorder %s24, 0
    %p119 = por %p117, %p118
    %p120 = scmp.le.s32.totalorder 1, %s18
    %p121 = scmp.lt.s32.totalorder %s18, 5
    %p122 = pnand %p120, %p121
    %p123 = pneg %p122
    // Predicated region
    $region9: #{time_stretch_augmentation.1} parent=5 // pred_check
      _
    $region10: #{time_stretch_augmentation.1} parent=5 // pred_check_branch
      %125 = sbr.rel (%p122) target = $region12
    $region11: #{time_stretch_augmentation.1} parent=5 // pred_region
      %s126 = ssub.s32 %s18, 1
      // Predicated region
      $region13: #{time_stretch_augmentation.1} parent=11 // pred_check
        %p127 = pneg %p39
      $region14: #{time_stretch_augmentation.1} parent=11 // pred_check_branch
        %129 = sbr.rel (%p127) target = $region16
      $region15: #{time_stretch_augmentation.1} parent=11 // pred_region
        _
      $region16: #{time_stretch_augmentation.1} parent=11 // pred_fallthru
        _
      // Predicated region
      $region17: #{time_stretch_augmentation.1} parent=11 // pred_check
        %p130 = pneg %p60
      $region18: #{time_stretch_augmentation.1} parent=11 // pred_check_branch
        %132 = sbr.rel (%p130) target = $region20
      $region19: #{time_stretch_augmentation.1} parent=11 // pred_region
        _
      $region20: #{time_stretch_augmentation.1} parent=11 // pred_fallthru
        _
    $region12: #{time_stretch_augmentation.1} parent=5 // pred_fallthru
      _
    %p133 = scmp.lt.s32.totalorder %s18, 4
    // Predicated region
    $region21: #{time_stretch_augmentation.1} parent=5 // pred_check
      %p134 = pneg %p133
    $region22: #{time_stretch_augmentation.1} parent=5 // pred_check_branch
      %136 = sbr.rel (%p134) target = $region24
    $region23: #{time_stretch_augmentation.1} parent=5 // pred_region
      // Predicated region
      $region25: #{time_stretch_augmentation.1} parent=23 // pred_check
        %p137 = pneg %p80
      $region26: #{time_stretch_augmentation.1} parent=23 // pred_check_branch
        %139 = sbr.rel (%p137) target = $region28
      $region27: #{time_stretch_augmentation.1} parent=23 // pred_region
        %s140 = smul.u32 4, %s18
        %p141 = scmp.lt.s32.totalorder %s140, 15
        %s142 = scalar_select %p141, %s140, 15
        %s143 = smul.addr %s142, 8
        %s144 = scalar_lea.vmem %s3, %s143
        %s145 = smul.u32 4, %s18
      $region28: #{time_stretch_augmentation.1} parent=23 // pred_fallthru
        _
    $region24: #{time_stretch_augmentation.1} parent=5 // pred_fallthru
      _
    %p146 = scmp.le.s32.totalorder 1, %s18
    %p147 = scmp.lt.s32.totalorder %s18, 5
    %p148 = pnand %p146, %p147
    %p149 = pneg %p148
    // Predicated region
    $region29: #{time_stretch_augmentation.1} parent=5 // pred_check
      _
    $region30: #{time_stretch_augmentation.1} parent=5 // pred_check_branch
      %151 = sbr.rel (%p148) target = $region32
    $region31: #{time_stretch_augmentation.1} parent=5 // pred_region
      %s152 = ssub.s32 %s18, 1
      %p153 = pneg %p39
      %p154 = pneg %p36
      %p155 = pneg %p60
      %p156 = pneg %p57
      %s157 = smul.u32 4, %s23
      %p158 = scmp.lt.s32.totalorder %s157, 15
      %s159 = scalar_select %p158, %s157, 15
      %s160 = smul.addr %s159, 8
      %s161 = scalar_lea.vmem %s3, %s160
      %p162 = pneg %p86
      %p163 = pneg %p83
      %p164 = pneg %p112
      %p165 = pneg %p109
      %s166 = smul.u32 4, %s23
      %p167 = scmp.lt.s32.totalorder %s166, 15
      %s168 = scalar_select %p167, %s166, 15
      %s169 = smul.addr %s168, 8
      %s170 = scalar_lea.vmem %s4, %s169
      %s171 = smul.u32 4, %s23
      %p172 = scmp.lt.s32.totalorder %s171, 15
      %s173 = scalar_select %p172, %s171, 15
      %s174 = smul.addr %s173, 8
      %s175 = scalar_lea.vmem %s3, %s174
      %s176 = smul.u32 4, %s23
      %s177 = smul.u32 4, %s23
      %p178 = scmp.lt.s32.totalorder %s177, 15
      %s179 = scalar_select %p178, %s177, 15
      %s180 = smul.addr %s179, 8
      %s181 = scalar_lea.vmem %s4, %s180
      %s182 = smul.u32 4, %s23
      %s183 = sld [smem:[#allocation3 + %s23]]
      %s184 = sshra.s32 %s183, 7
      %s185 = sand.u32 %s183, 127
      %s186 = smul.addr %s184, 8
      %s187 = scalar_lea.vmem %s1, %s186
      %v188 = vld [vmem:[%s187] sm:$0xff]
      %v189 = vld [vmem:[%s187 + $0x8] sm:$0xff]
      %v190 = vld [vmem:[%s187 + $0x10] sm:$0xff]
      %v191 = vld [vmem:[%s187 + $0x18] sm:$0xff]
      %v192 = vld [vmem:[%s187 + $0x20] sm:$0xff]
      %v193 = vld [vmem:[%s187 + $0x28] sm:$0xff]
      %v194 = vld [vmem:[%s175] sm:$0xff]
      %v195 = vld [vmem:[%s175 + $0x8] sm:$0xff]
      %v196 = vld [vmem:[%s175 + $0x10] sm:$0xff]
      %v197 = vld [vmem:[%s175 + $0x18] sm:$0xff]
      %v198 = vld [vmem:[%s2] sm:$0xff]
      %v199 = vld [vmem:[%s2 + $0x8] sm:$0xff]
      %v200 = vld [vmem:[%s2 + $0x10] sm:$0xff]
      %v201 = vld [vmem:[%s2 + $0x18] sm:$0xff]
      %v202 = vld [vmem:[%s2 + $0x20] sm:$0xff]
      %v203 = vld [vmem:[%s2 + $0x28] sm:$0xff]
      %v204 = vld [vmem:[%s2 + $0x30] sm:$0xff]
      %v205 = vld [vmem:[%s2 + $0x38] sm:$0xff]
      %v206 = vld [vmem:[%s2 + $0x40] sm:$0xff]
      %v207 = vld [vmem:[%s2 + $0x48] sm:$0xff]
      %v208 = vld [vmem:[%s2 + $0x50] sm:$0xff]
      %v209 = vld [vmem:[%s2 + $0x58] sm:$0xff]
      %v210 = vld [vmem:[%s2 + $0x60] sm:$0xff]
      %v211 = vld [vmem:[%s2 + $0x68] sm:$0xff]
      %v212 = vld [vmem:[%s2 + $0x70] sm:$0xff]
      %v213 = vld [vmem:[%s2 + $0x78] sm:$0xff]
      %v214 = vld [vmem:[%s2 + $0x80] sm:$0xff]
      %v215 = vld [vmem:[%s2 + $0x88] sm:$0xff]
      %v216 = vld [vmem:[%s2 + $0x90] sm:$0xff]
      %v217 = vld [vmem:[%s2 + $0x98] sm:$0xff]
      %v218 = vld [vmem:[%s2 + $0xa0] sm:$0xff]
      %v219 = vld [vmem:[%s2 + $0xa8] sm:$0xff]
      %v220 = vld [vmem:[%s2 + $0xb0] sm:$0xff]
      %v221 = vld [vmem:[%s2 + $0xb8] sm:$0xff]
      %v222 = vld [vmem:[%s2 + $0xc0] sm:$0xff]
      %v223 = vld [vmem:[%s2 + $0xc8] sm:$0xff]
      %v224 = vld [vmem:[%s2 + $0xd0] sm:$0xff]
      %v225 = vld [vmem:[%s2 + $0xd8] sm:$0xff]
      %v226 = vld [vmem:[%s2 + $0xe0] sm:$0xff]
      %v227 = vld [vmem:[%s2 + $0xe8] sm:$0xff]
      %v228 = vld [vmem:[%s2 + $0xf0] sm:$0xff]
      %v229 = vld [vmem:[%s2 + $0xf8] sm:$0xff]
      %v230 = vld [vmem:[%s2 + $0x100] sm:$0xff]
      %v231 = vld [vmem:[%s2 + $0x108] sm:$0xff]
      %v232 = vld [vmem:[%s2 + $0x110] sm:$0xff]
      %v233 = vld [vmem:[%s2 + $0x118] sm:$0xff]
      %v234 = vld [vmem:[%s2 + $0x120] sm:$0xff]
      %v235 = vld [vmem:[%s2 + $0x128] sm:$0xff]
      %v236 = vld [vmem:[%s2 + $0x130] sm:$0xff]
      %v237 = vld [vmem:[%s2 + $0x138] sm:$0xff]
      %v238 = vld [vmem:[%s2 + $0x140] sm:$0xff]
      %v239 = vld [vmem:[%s2 + $0x148] sm:$0xff]
      %v240 = vld [vmem:[%s2 + $0x150] sm:$0xff]
      %v241 = vld [vmem:[%s2 + $0x158] sm:$0xff]
      %v242 = vld [vmem:[%s2 + $0x160] sm:$0xff]
      %v243 = vld [vmem:[%s2 + $0x168] sm:$0xff]
      %v244 = vld [vmem:[%s2 + $0x170] sm:$0xff]
      %v245 = vld [vmem:[%s2 + $0x178] sm:$0xff]
      %v246 = vld [vmem:[%s2 + $0x180] sm:$0xff]
      %v247 = vld [vmem:[%s2 + $0x188] sm:$0xff]
      %v248 = vld [vmem:[%s2 + $0x190] sm:$0xff]
      %v249 = vld [vmem:[%s2 + $0x198] sm:$0xff]
      %v250 = vld [vmem:[%s2 + $0x1a0] sm:$0xff]
      %v251 = vld [vmem:[%s2 + $0x1a8] sm:$0xff]
      %v252 = vld [vmem:[%s2 + $0x1b0] sm:$0xff]
      %v253 = vld [vmem:[%s2 + $0x1b8] sm:$0xff]
      %v254 = vld [vmem:[%s2 + $0x1c0] sm:$0xff]
      %v255 = vld [vmem:[%s2 + $0x1c8] sm:$0xff]
      %v256 = vld [vmem:[%s2 + $0x1d0] sm:$0xff]
      %v257 = vld [vmem:[%s2 + $0x1d8] sm:$0xff]
      %v258 = vld [vmem:[%s2 + $0x1e0] sm:$0xff]
      %v259 = vld [vmem:[%s2 + $0x1e8] sm:$0xff]
      %v260 = vld [vmem:[%s2 + $0x1f0] sm:$0xff]
      %v261 = vld [vmem:[%s2 + $0x1f8] sm:$0xff]
      %v262 = vld [vmem:[%s2 + $0x200] sm:$0xff]
      %v263 = vld [vmem:[%s2 + $0x208] sm:$0xff]
      %v264 = vld [vmem:[%s2 + $0x210] sm:$0xff]
      %v265 = vld [vmem:[%s2 + $0x218] sm:$0xff]
      %v266 = vld [vmem:[%s2 + $0x220] sm:$0xff]
      %v267 = vld [vmem:[%s2 + $0x228] sm:$0xff]
      %v268 = vld [vmem:[%s2 + $0x230] sm:$0xff]
      %v269 = vld [vmem:[%s2 + $0x238] sm:$0xff]
      %v270 = vld [vmem:[%s2 + $0x240] sm:$0xff]
      %v271 = vld [vmem:[%s2 + $0x248] sm:$0xff]
      %v272 = vld [vmem:[%s2 + $0x250] sm:$0xff]
      %v273 = vld [vmem:[%s2 + $0x258] sm:$0xff]
      %v274 = vld [vmem:[%s2 + $0x260] sm:$0xff]
      %v275 = vld [vmem:[%s2 + $0x268] sm:$0xff]
      %v276 = vld [vmem:[%s2 + $0x270] sm:$0xff]
      %v277 = vld [vmem:[%s2 + $0x278] sm:$0xff]
      %v278 = vld [vmem:[%s2 + $0x280] sm:$0xff]
      %v279 = vld [vmem:[%s2 + $0x288] sm:$0xff]
      %v280 = vld [vmem:[%s2 + $0x290] sm:$0xff]
      %v281 = vld [vmem:[%s2 + $0x298] sm:$0xff]
      %v282 = vld [vmem:[%s2 + $0x2a0] sm:$0xff]
      %v283 = vld [vmem:[%s2 + $0x2a8] sm:$0xff]
      %v284 = vld [vmem:[%s2 + $0x2b0] sm:$0xff]
      %v285 = vld [vmem:[%s2 + $0x2b8] sm:$0xff]
      %v286 = vld [vmem:[%s2 + $0x2c0] sm:$0xff]
      %v287 = vld [vmem:[%s2 + $0x2c8] sm:$0xff]
      %v288 = vld [vmem:[%s2 + $0x2d0] sm:$0xff]
      %v289 = vld [vmem:[%s2 + $0x2d8] sm:$0xff]
      %v290 = vld [vmem:[%s2 + $0x2e0] sm:$0xff]
      %v291 = vld [vmem:[%s2 + $0x2e8] sm:$0xff]
      %v292 = vld [vmem:[%s2 + $0x2f0] sm:$0xff]
      %v293 = vld [vmem:[%s2 + $0x2f8] sm:$0xff]
      %v294 = vld [vmem:[%s2 + $0x300] sm:$0xff]
      %v295 = vld [vmem:[%s2 + $0x308] sm:$0xff]
      %v296 = vld [vmem:[%s2 + $0x310] sm:$0xff]
      %v297 = vld [vmem:[%s2 + $0x318] sm:$0xff]
      %v298 = vld [vmem:[%s2 + $0x320] sm:$0xff]
      %v299 = vld [vmem:[%s2 + $0x328] sm:$0xff]
      %v300 = vld [vmem:[%s2 + $0x330] sm:$0xff]
      %v301 = vld [vmem:[%s2 + $0x338] sm:$0xff]
      %v302 = vld [vmem:[%s2 + $0x340] sm:$0xff]
      %v303 = vld [vmem:[%s2 + $0x348] sm:$0xff]
      %v304 = vld [vmem:[%s2 + $0x350] sm:$0xff]
      %v305 = vld [vmem:[%s2 + $0x358] sm:$0xff]
      %v306 = vld [vmem:[%s2 + $0x360] sm:$0xff]
      %v307 = vld [vmem:[%s2 + $0x368] sm:$0xff]
      %v308 = vld [vmem:[%s2 + $0x370] sm:$0xff]
      %v309 = vld [vmem:[%s2 + $0x378] sm:$0xff]
      %v310 = vld [vmem:[%s2 + $0x380] sm:$0xff]
      %v311 = vld [vmem:[%s2 + $0x388] sm:$0xff]
      %v312 = vld [vmem:[%s2 + $0x390] sm:$0xff]
      %v313 = vld [vmem:[%s2 + $0x398] sm:$0xff]
      %v314 = vld [vmem:[%s2 + $0x3a0] sm:$0xff]
      %v315 = vld [vmem:[%s2 + $0x3a8] sm:$0xff]
      %v316 = vld [vmem:[%s2 + $0x3b0] sm:$0xff]
      %v317 = vld [vmem:[%s2 + $0x3b8] sm:$0xff]
      %v318 = vld [vmem:[%s2 + $0x3c0] sm:$0xff]
      %v319 = vld [vmem:[%s2 + $0x3c8] sm:$0xff]
      %v320 = vld [vmem:[%s2 + $0x3d0] sm:$0xff]
      %v321 = vld [vmem:[%s2 + $0x3d8] sm:$0xff]
      %v322 = vld [vmem:[%s2 + $0x3e0] sm:$0xff]
      %v323 = vld [vmem:[%s2 + $0x3e8] sm:$0xff]
      %v324 = vld [vmem:[%s2 + $0x3f0] sm:$0xff]
      %v325 = vld [vmem:[%s2 + $0x3f8] sm:$0xff]
      %v326 = vld [vmem:[%s2 + $0x400] sm:$0xff]
      %v327 = vld [vmem:[%s2 + $0x408] sm:$0xff]
      %v328 = vld [vmem:[%s2 + $0x410] sm:$0xff]
      %v329 = vld [vmem:[%s2 + $0x418] sm:$0xff]
      %v330 = vld [vmem:[%s2 + $0x420] sm:$0xff]
      %v331 = vld [vmem:[%s2 + $0x428] sm:$0xff]
      %v332 = vld [vmem:[%s2 + $0x430] sm:$0xff]
      %v333 = vld [vmem:[%s2 + $0x438] sm:$0xff]
      %v334 = vld [vmem:[%s2 + $0x440] sm:$0xff]
      %v335 = vld [vmem:[%s2 + $0x448] sm:$0xff]
      %v336 = vld [vmem:[%s2 + $0x450] sm:$0xff]
      %v337 = vld [vmem:[%s2 + $0x458] sm:$0xff]
      %v338 = vld [vmem:[%s2 + $0x460] sm:$0xff]
      %v339 = vld [vmem:[%s2 + $0x468] sm:$0xff]
      %v340 = vld [vmem:[%s2 + $0x470] sm:$0xff]
      %v341 = vld [vmem:[%s2 + $0x478] sm:$0xff]
      %v342 = vld [vmem:[%s2 + $0x480] sm:$0xff]
      %v343 = vld [vmem:[%s2 + $0x488] sm:$0xff]
      %v344 = vld [vmem:[%s2 + $0x490] sm:$0xff]
      %v345 = vld [vmem:[%s2 + $0x498] sm:$0xff]
      %v346 = vld [vmem:[%s2 + $0x4a0] sm:$0xff]
      %v347 = vld [vmem:[%s2 + $0x4a8] sm:$0xff]
      %v348 = vld [vmem:[%s2 + $0x4b0] sm:$0xff]
      %v349 = vld [vmem:[%s2 + $0x4b8] sm:$0xff]
      %v350 = vld [vmem:[%s2 + $0x4c0] sm:$0xff]
      %v351 = vld [vmem:[%s2 + $0x4c8] sm:$0xff]
      %v352 = vld [vmem:[%s2 + $0x4d0] sm:$0xff]
      %v353 = vld [vmem:[%s2 + $0x4d8] sm:$0xff]
      %v354 = vld [vmem:[%s2 + $0x4e0] sm:$0xff]
      %v355 = vld [vmem:[%s2 + $0x4e8] sm:$0xff]
      %v356 = vld [vmem:[%s2 + $0x4f0] sm:$0xff]
      %v357 = vld [vmem:[%s2 + $0x4f8] sm:$0xff]
      %v358 = vld [vmem:[%s2 + $0x500] sm:$0xff]
      %v359 = vld [vmem:[%s2 + $0x508] sm:$0xff]
      %v360 = vld [vmem:[%s2 + $0x510] sm:$0xff]
      %v361 = vld [vmem:[%s2 + $0x518] sm:$0xff]
      %v362 = vld [vmem:[%s2 + $0x520] sm:$0xff]
      %v363 = vld [vmem:[%s2 + $0x528] sm:$0xff]
      %v364 = vld [vmem:[%s2 + $0x530] sm:$0xff]
      %v365 = vld [vmem:[%s2 + $0x538] sm:$0xff]
      %v366 = vld [vmem:[%s2 + $0x540] sm:$0xff]
      %v367 = vld [vmem:[%s2 + $0x548] sm:$0xff]
      %v368 = vld [vmem:[%s2 + $0x550] sm:$0xff]
      %v369 = vld [vmem:[%s2 + $0x558] sm:$0xff]
      %v370 = vld [vmem:[%s2 + $0x560] sm:$0xff]
      %v371 = vld [vmem:[%s2 + $0x568] sm:$0xff]
      %v372 = vld [vmem:[%s2 + $0x570] sm:$0xff]
      %v373 = vld [vmem:[%s2 + $0x578] sm:$0xff]
      %v374 = vld [vmem:[%s2 + $0x580] sm:$0xff]
      %v375 = vld [vmem:[%s2 + $0x588] sm:$0xff]
      %v376 = vld [vmem:[%s2 + $0x590] sm:$0xff]
      %v377 = vld [vmem:[%s2 + $0x598] sm:$0xff]
      %v378 = vld [vmem:[%s2 + $0x5a0] sm:$0xff]
      %v379 = vld [vmem:[%s2 + $0x5a8] sm:$0xff]
      %v380 = vld [vmem:[%s2 + $0x5b0] sm:$0xff]
      %v381 = vld [vmem:[%s2 + $0x5b8] sm:$0xff]
      %v382 = vld [vmem:[%s2 + $0x5c0] sm:$0xff]
      %v383 = vld [vmem:[%s2 + $0x5c8] sm:$0xff]
      %v384 = vld [vmem:[%s2 + $0x5d0] sm:$0xff]
      %v385 = vld [vmem:[%s2 + $0x5d8] sm:$0xff]
      %v386 = vld [vmem:[%s2 + $0x5e0] sm:$0xff]
      %v387 = vld [vmem:[%s2 + $0x5e8] sm:$0xff]
      %v388 = vld [vmem:[%s2 + $0x5f0] sm:$0xff]
      %v389 = vld [vmem:[%s2 + $0x5f8] sm:$0xff]
      %v390 = vld [vmem:[%s2 + $0x600] sm:$0xff]
      %v391 = vld [vmem:[%s2 + $0x608] sm:$0xff]
      %v392 = vld [vmem:[%s2 + $0x610] sm:$0xff]
      %v393 = vld [vmem:[%s2 + $0x618] sm:$0xff]
      %v394 = vld [vmem:[%s2 + $0x620] sm:$0xff]
      %v395 = vld [vmem:[%s2 + $0x628] sm:$0xff]
      %v396 = vld [vmem:[%s2 + $0x630] sm:$0xff]
      %v397 = vld [vmem:[%s2 + $0x638] sm:$0xff]
      %v398 = vld [vmem:[%s2 + $0x640] sm:$0xff]
      %v399 = vld [vmem:[%s2 + $0x648] sm:$0xff]
      %v400 = vld [vmem:[%s2 + $0x650] sm:$0xff]
      %v401 = vld [vmem:[%s2 + $0x658] sm:$0xff]
      %v402 = vld [vmem:[%s2 + $0x660] sm:$0xff]
      %v403 = vld [vmem:[%s2 + $0x668] sm:$0xff]
      %v404 = vld [vmem:[%s2 + $0x670] sm:$0xff]
      %v405 = vld [vmem:[%s2 + $0x678] sm:$0xff]
      %v406 = vld [vmem:[%s2 + $0x680] sm:$0xff]
      %v407 = vld [vmem:[%s2 + $0x688] sm:$0xff]
      %v408 = vld [vmem:[%s2 + $0x690] sm:$0xff]
      %v409 = vld [vmem:[%s2 + $0x698] sm:$0xff]
      %v410 = vld [vmem:[%s2 + $0x6a0] sm:$0xff]
      %v411 = vld [vmem:[%s2 + $0x6a8] sm:$0xff]
      %v412 = vld [vmem:[%s2 + $0x6b0] sm:$0xff]
      %v413 = vld [vmem:[%s2 + $0x6b8] sm:$0xff]
      %v414 = vld [vmem:[%s2 + $0x6c0] sm:$0xff]
      %v415 = vld [vmem:[%s2 + $0x6c8] sm:$0xff]
      %v416 = vld [vmem:[%s2 + $0x6d0] sm:$0xff]
      %v417 = vld [vmem:[%s2 + $0x6d8] sm:$0xff]
      %v418 = vld [vmem:[%s2 + $0x6e0] sm:$0xff]
      %v419 = vld [vmem:[%s2 + $0x6e8] sm:$0xff]
      %v420 = vld [vmem:[%s2 + $0x6f0] sm:$0xff]
      %v421 = vld [vmem:[%s2 + $0x6f8] sm:$0xff]
      %v422 = vld [vmem:[%s2 + $0x700] sm:$0xff]
      %v423 = vld [vmem:[%s2 + $0x708] sm:$0xff]
      %v424 = vld [vmem:[%s2 + $0x710] sm:$0xff]
      %v425 = vld [vmem:[%s2 + $0x718] sm:$0xff]
      %v426 = vld [vmem:[%s2 + $0x720] sm:$0xff]
      %v427 = vld [vmem:[%s2 + $0x728] sm:$0xff]
      %v428 = vld [vmem:[%s2 + $0x730] sm:$0xff]
      %v429 = vld [vmem:[%s2 + $0x738] sm:$0xff]
      %v430 = vld [vmem:[%s2 + $0x740] sm:$0xff]
      %v431 = vld [vmem:[%s2 + $0x748] sm:$0xff]
      %v432 = vld [vmem:[%s2 + $0x750] sm:$0xff]
      %v433 = vld [vmem:[%s2 + $0x758] sm:$0xff]
      %v434 = vld [vmem:[%s2 + $0x760] sm:$0xff]
      %v435 = vld [vmem:[%s2 + $0x768] sm:$0xff]
      %v436 = vld [vmem:[%s2 + $0x770] sm:$0xff]
      %v437 = vld [vmem:[%s2 + $0x778] sm:$0xff]
      %v438 = vld [vmem:[%s2 + $0x780] sm:$0xff]
      %v439 = vld [vmem:[%s2 + $0x788] sm:$0xff]
      %v440 = vld [vmem:[%s2 + $0x790] sm:$0xff]
      %v441 = vld [vmem:[%s2 + $0x798] sm:$0xff]
      %v442 = vld [vmem:[%s2 + $0x7a0] sm:$0xff]
      %v443 = vld [vmem:[%s2 + $0x7a8] sm:$0xff]
      %v444 = vld [vmem:[%s2 + $0x7b0] sm:$0xff]
      %v445 = vld [vmem:[%s2 + $0x7b8] sm:$0xff]
      %v446 = vld [vmem:[%s2 + $0x7c0] sm:$0xff]
      %v447 = vld [vmem:[%s2 + $0x7c8] sm:$0xff]
      %v448 = vld [vmem:[%s2 + $0x7d0] sm:$0xff]
      %v449 = vld [vmem:[%s2 + $0x7d8] sm:$0xff]
      %v450 = vld [vmem:[%s2 + $0x7e0] sm:$0xff]
      %v451 = vld [vmem:[%s2 + $0x7e8] sm:$0xff]
      %v452 = vld [vmem:[%s2 + $0x7f0] sm:$0xff]
      %v453 = vld [vmem:[%s2 + $0x7f8] sm:$0xff]
      %v454 = vld [vmem:[%s2 + $0x800] sm:$0xff]
      %v455 = vld [vmem:[%s2 + $0x808] sm:$0xff]
      %v456 = vld [vmem:[%s2 + $0x810] sm:$0xff]
      %v457 = vld [vmem:[%s2 + $0x818] sm:$0xff]
      %v458 = vld [vmem:[%s2 + $0x820] sm:$0xff]
      %v459 = vld [vmem:[%s2 + $0x828] sm:$0xff]
      %v460 = vld [vmem:[%s2 + $0x830] sm:$0xff]
      %v461 = vld [vmem:[%s2 + $0x838] sm:$0xff]
      %v462 = vld [vmem:[%s2 + $0x840] sm:$0xff]
      %v463 = vld [vmem:[%s2 + $0x848] sm:$0xff]
      %v464 = vld [vmem:[%s2 + $0x850] sm:$0xff]
      %v465 = vld [vmem:[%s2 + $0x858] sm:$0xff]
      %v466 = vld [vmem:[%s2 + $0x860] sm:$0xff]
      %v467 = vld [vmem:[%s2 + $0x868] sm:$0xff]
      %v468 = vld [vmem:[%s2 + $0x870] sm:$0xff]
      %v469 = vld [vmem:[%s2 + $0x878] sm:$0xff]
      %v470 = vld [vmem:[%s2 + $0x880] sm:$0xff]
      %v471 = vld [vmem:[%s2 + $0x888] sm:$0xff]
      %v472 = vld [vmem:[%s2 + $0x890] sm:$0xff]
      %v473 = vld [vmem:[%s2 + $0x898] sm:$0xff]
      %v474 = vld [vmem:[%s2 + $0x8a0] sm:$0xff]
      %v475 = vld [vmem:[%s2 + $0x8a8] sm:$0xff]
      %v476 = vld [vmem:[%s2 + $0x8b0] sm:$0xff]
      %v477 = vld [vmem:[%s2 + $0x8b8] sm:$0xff]
      %v478 = vld [vmem:[%s2 + $0x8c0] sm:$0xff]
      %v479 = vld [vmem:[%s2 + $0x8c8] sm:$0xff]
      %v480 = vld [vmem:[%s2 + $0x8d0] sm:$0xff]
      %v481 = vld [vmem:[%s2 + $0x8d8] sm:$0xff]
      %v482 = vld [vmem:[%s2 + $0x8e0] sm:$0xff]
      %v483 = vld [vmem:[%s2 + $0x8e8] sm:$0xff]
      %v484 = vld [vmem:[%s2 + $0x8f0] sm:$0xff]
      %v485 = vld [vmem:[%s2 + $0x8f8] sm:$0xff]
      %v486 = vld [vmem:[%s2 + $0x900] sm:$0xff]
      %v487 = vld [vmem:[%s2 + $0x908] sm:$0xff]
      %v488 = vld [vmem:[%s2 + $0x910] sm:$0xff]
      %v489 = vld [vmem:[%s2 + $0x918] sm:$0xff]
      %v490 = vld [vmem:[%s2 + $0x920] sm:$0xff]
      %v491 = vld [vmem:[%s2 + $0x928] sm:$0xff]
      %v492 = vld [vmem:[%s2 + $0x930] sm:$0xff]
      %v493 = vld [vmem:[%s2 + $0x938] sm:$0xff]
      %v494 = vld [vmem:[%s2 + $0x940] sm:$0xff]
      %v495 = vld [vmem:[%s2 + $0x948] sm:$0xff]
      %v496 = vld [vmem:[%s2 + $0x950] sm:$0xff]
      %v497 = vld [vmem:[%s2 + $0x958] sm:$0xff]
      %v498 = vld [vmem:[%s2 + $0x960] sm:$0xff]
      %v499 = vld [vmem:[%s2 + $0x968] sm:$0xff]
      %v500 = vld [vmem:[%s2 + $0x970] sm:$0xff]
      %v501 = vld [vmem:[%s2 + $0x978] sm:$0xff]
      %v502 = vld [vmem:[%s2 + $0x980] sm:$0xff]
      %v503 = vld [vmem:[%s2 + $0x988] sm:$0xff]
      %v504 = vld [vmem:[%s2 + $0x990] sm:$0xff]
      %v505 = vld [vmem:[%s2 + $0x998] sm:$0xff]
      %v506 = vld [vmem:[%s2 + $0x9a0] sm:$0xff]
      %v507 = vld [vmem:[%s2 + $0x9a8] sm:$0xff]
      %v508 = vld [vmem:[%s2 + $0x9b0] sm:$0xff]
      %v509 = vld [vmem:[%s2 + $0x9b8] sm:$0xff]
      %v510 = vld [vmem:[%s2 + $0x9c0] sm:$0xff]
      %v511 = vld [vmem:[%s2 + $0x9c8] sm:$0xff]
      %v512 = vld [vmem:[%s2 + $0x9d0] sm:$0xff]
      %v513 = vld [vmem:[%s2 + $0x9d8] sm:$0xff]
      %v514 = vld [vmem:[%s2 + $0x9e0] sm:$0xff]
      %v515 = vld [vmem:[%s2 + $0x9e8] sm:$0xff]
      %v516 = vld [vmem:[%s2 + $0x9f0] sm:$0xff]
      %v517 = vld [vmem:[%s2 + $0x9f8] sm:$0xff]
      %v518 = vld [vmem:[%s2 + $0xa00] sm:$0xff]
      %v519 = vld [vmem:[%s2 + $0xa08] sm:$0xff]
      %v520 = vld [vmem:[%s2 + $0xa10] sm:$0xff]
      %v521 = vld [vmem:[%s2 + $0xa18] sm:$0xff]
      %v522 = vld [vmem:[%s2 + $0xa20] sm:$0xff]
      %v523 = vld [vmem:[%s2 + $0xa28] sm:$0xff]
      %v524 = vld [vmem:[%s2 + $0xa30] sm:$0xff]
      %v525 = vld [vmem:[%s2 + $0xa38] sm:$0xff]
      %v526 = vld [vmem:[%s2 + $0xa40] sm:$0xff]
      %v527 = vld [vmem:[%s2 + $0xa48] sm:$0xff]
      %v528 = vld [vmem:[%s2 + $0xa50] sm:$0xff]
      %v529 = vld [vmem:[%s2 + $0xa58] sm:$0xff]
      %v530 = vld [vmem:[%s2 + $0xa60] sm:$0xff]
      %v531 = vld [vmem:[%s2 + $0xa68] sm:$0xff]
      %v532 = vld [vmem:[%s2 + $0xa70] sm:$0xff]
      %v533 = vld [vmem:[%s2 + $0xa78] sm:$0xff]
      %v534 = vld [vmem:[%s2 + $0xa80] sm:$0xff]
      %v535 = vld [vmem:[%s2 + $0xa88] sm:$0xff]
      %v536 = vld [vmem:[%s2 + $0xa90] sm:$0xff]
      %v537 = vld [vmem:[%s2 + $0xa98] sm:$0xff]
      %v538 = vld [vmem:[%s2 + $0xaa0] sm:$0xff]
      %v539 = vld [vmem:[%s2 + $0xaa8] sm:$0xff]
      %v540 = vld [vmem:[%s2 + $0xab0] sm:$0xff]
      %v541 = vld [vmem:[%s2 + $0xab8] sm:$0xff]
      %v542 = vld [vmem:[%s2 + $0xac0] sm:$0xff]
      %v543 = vld [vmem:[%s2 + $0xac8] sm:$0xff]
      %v544 = vld [vmem:[%s2 + $0xad0] sm:$0xff]
      %v545 = vld [vmem:[%s2 + $0xad8] sm:$0xff]
      %v546 = vld [vmem:[%s2 + $0xae0] sm:$0xff]
      %v547 = vld [vmem:[%s2 + $0xae8] sm:$0xff]
      %v548 = vld [vmem:[%s2 + $0xaf0] sm:$0xff]
      %v549 = vld [vmem:[%s2 + $0xaf8] sm:$0xff]
      %v550 = vld [vmem:[%s2 + $0xb00] sm:$0xff]
      %v551 = vld [vmem:[%s2 + $0xb08] sm:$0xff]
      %v552 = vld [vmem:[%s2 + $0xb10] sm:$0xff]
      %v553 = vld [vmem:[%s2 + $0xb18] sm:$0xff]
      %v554 = vld [vmem:[%s2 + $0xb20] sm:$0xff]
      %v555 = vld [vmem:[%s2 + $0xb28] sm:$0xff]
      %v556 = vld [vmem:[%s2 + $0xb30] sm:$0xff]
      %v557 = vld [vmem:[%s2 + $0xb38] sm:$0xff]
      %v558 = vld [vmem:[%s2 + $0xb40] sm:$0xff]
      %v559 = vld [vmem:[%s2 + $0xb48] sm:$0xff]
      %v560 = vld [vmem:[%s2 + $0xb50] sm:$0xff]
      %v561 = vld [vmem:[%s2 + $0xb58] sm:$0xff]
      %v562 = vld [vmem:[%s2 + $0xb60] sm:$0xff]
      %v563 = vld [vmem:[%s2 + $0xb68] sm:$0xff]
      %v564 = vld [vmem:[%s2 + $0xb70] sm:$0xff]
      %v565 = vld [vmem:[%s2 + $0xb78] sm:$0xff]
      %v566 = vld [vmem:[%s2 + $0xb80] sm:$0xff]
      %v567 = vld [vmem:[%s2 + $0xb88] sm:$0xff]
      %v568 = vld [vmem:[%s2 + $0xb90] sm:$0xff]
      %v569 = vld [vmem:[%s2 + $0xb98] sm:$0xff]
      %v570 = vld [vmem:[%s2 + $0xba0] sm:$0xff]
      %v571 = vld [vmem:[%s2 + $0xba8] sm:$0xff]
      %v572 = vld [vmem:[%s2 + $0xbb0] sm:$0xff]
      %v573 = vld [vmem:[%s2 + $0xbb8] sm:$0xff]
      %v574 = vld [vmem:[%s2 + $0xbc0] sm:$0xff]
      %v575 = vld [vmem:[%s2 + $0xbc8] sm:$0xff]
      %v576 = vld [vmem:[%s2 + $0xbd0] sm:$0xff]
      %v577 = vld [vmem:[%s2 + $0xbd8] sm:$0xff]
      %v578 = vld [vmem:[%s2 + $0xbe0] sm:$0xff]
      %v579 = vld [vmem:[%s2 + $0xbe8] sm:$0xff]
      %v580 = vld [vmem:[%s2 + $0xbf0] sm:$0xff]
      %v581 = vld [vmem:[%s2 + $0xbf8] sm:$0xff]
      %v582 = vperm.slane %v194, 0
      %v583 = vperm.slane %v195, 0
      %v584 = vperm.slane %v196, 0
      %v585 = vperm.slane %v197, 0
      %vm586 = vcmp.eq.f32.partialorder %v198, %v582
      %vm587 = vcmp.eq.f32.partialorder %v199, %v583
      %vm588 = vcmp.eq.f32.partialorder %v200, %v584
      %vm589 = vcmp.eq.f32.partialorder %v201, %v585
      %vm590 = vcmp.eq.f32.partialorder %v202, %v582
      %vm591 = vcmp.eq.f32.partialorder %v203, %v583
      %vm592 = vcmp.eq.f32.partialorder %v204, %v584
      %vm593 = vcmp.eq.f32.partialorder %v205, %v585
      %vm594 = vcmp.eq.f32.partialorder %v206, %v582
      %vm595 = vcmp.eq.f32.partialorder %v207, %v583
      %vm596 = vcmp.eq.f32.partialorder %v208, %v584
      %vm597 = vcmp.eq.f32.partialorder %v209, %v585
      %vm598 = vcmp.eq.f32.partialorder %v210, %v582
      %vm599 = vcmp.eq.f32.partialorder %v211, %v583
      %vm600 = vcmp.eq.f32.partialorder %v212, %v584
      %vm601 = vcmp.eq.f32.partialorder %v213, %v585
      %vm602 = vcmp.eq.f32.partialorder %v214, %v582
      %vm603 = vcmp.eq.f32.partialorder %v215, %v583
      %vm604 = vcmp.eq.f32.partialorder %v216, %v584
      %vm605 = vcmp.eq.f32.partialorder %v217, %v585
      %vm606 = vcmp.eq.f32.partialorder %v218, %v582
      %vm607 = vcmp.eq.f32.partialorder %v219, %v583
      %vm608 = vcmp.eq.f32.partialorder %v220, %v584
      %vm609 = vcmp.eq.f32.partialorder %v221, %v585
      %vm610 = vcmp.eq.f32.partialorder %v222, %v582
      %vm611 = vcmp.eq.f32.partialorder %v223, %v583
      %vm612 = vcmp.eq.f32.partialorder %v224, %v584
      %vm613 = vcmp.eq.f32.partialorder %v225, %v585
      %vm614 = vcmp.eq.f32.partialorder %v226, %v582
      %vm615 = vcmp.eq.f32.partialorder %v227, %v583
      %vm616 = vcmp.eq.f32.partialorder %v228, %v584
      %vm617 = vcmp.eq.f32.partialorder %v229, %v585
      %vm618 = vcmp.eq.f32.partialorder %v230, %v582
      %vm619 = vcmp.eq.f32.partialorder %v231, %v583
      %vm620 = vcmp.eq.f32.partialorder %v232, %v584
      %vm621 = vcmp.eq.f32.partialorder %v233, %v585
      %vm622 = vcmp.eq.f32.partialorder %v234, %v582
      %vm623 = vcmp.eq.f32.partialorder %v235, %v583
      %vm624 = vcmp.eq.f32.partialorder %v236, %v584
      %vm625 = vcmp.eq.f32.partialorder %v237, %v585
      %vm626 = vcmp.eq.f32.partialorder %v238, %v582
      %vm627 = vcmp.eq.f32.partialorder %v239, %v583
      %vm628 = vcmp.eq.f32.partialorder %v240, %v584
      %vm629 = vcmp.eq.f32.partialorder %v241, %v585
      %vm630 = vcmp.eq.f32.partialorder %v242, %v582
      %vm631 = vcmp.eq.f32.partialorder %v243, %v583
      %vm632 = vcmp.eq.f32.partialorder %v244, %v584
      %vm633 = vcmp.eq.f32.partialorder %v245, %v585
      %vm634 = vcmp.eq.f32.partialorder %v246, %v582
      %vm635 = vcmp.eq.f32.partialorder %v247, %v583
      %vm636 = vcmp.eq.f32.partialorder %v248, %v584
      %vm637 = vcmp.eq.f32.partialorder %v249, %v585
      %vm638 = vcmp.eq.f32.partialorder %v250, %v582
      %vm639 = vcmp.eq.f32.partialorder %v251, %v583
      %vm640 = vcmp.eq.f32.partialorder %v252, %v584
      %vm641 = vcmp.eq.f32.partialorder %v253, %v585
      %vm642 = vcmp.eq.f32.partialorder %v254, %v582
      %vm643 = vcmp.eq.f32.partialorder %v255, %v583
      %vm644 = vcmp.eq.f32.partialorder %v256, %v584
      %vm645 = vcmp.eq.f32.partialorder %v257, %v585
      %vm646 = vcmp.eq.f32.partialorder %v258, %v582
      %vm647 = vcmp.eq.f32.partialorder %v259, %v583
      %vm648 = vcmp.eq.f32.partialorder %v260, %v584
      %vm649 = vcmp.eq.f32.partialorder %v261, %v585
      %vm650 = vcmp.eq.f32.partialorder %v262, %v582
      %vm651 = vcmp.eq.f32.partialorder %v263, %v583
      %vm652 = vcmp.eq.f32.partialorder %v264, %v584
      %vm653 = vcmp.eq.f32.partialorder %v265, %v585
      %vm654 = vcmp.eq.f32.partialorder %v266, %v582
      %vm655 = vcmp.eq.f32.partialorder %v267, %v583
      %vm656 = vcmp.eq.f32.partialorder %v268, %v584
      %vm657 = vcmp.eq.f32.partialorder %v269, %v585
      %vm658 = vcmp.eq.f32.partialorder %v270, %v582
      %vm659 = vcmp.eq.f32.partialorder %v271, %v583
      %vm660 = vcmp.eq.f32.partialorder %v272, %v584
      %vm661 = vcmp.eq.f32.partialorder %v273, %v585
      %vm662 = vcmp.eq.f32.partialorder %v274, %v582
      %vm663 = vcmp.eq.f32.partialorder %v275, %v583
      %vm664 = vcmp.eq.f32.partialorder %v276, %v584
      %vm665 = vcmp.eq.f32.partialorder %v277, %v585
      %vm666 = vcmp.eq.f32.partialorder %v278, %v582
      %vm667 = vcmp.eq.f32.partialorder %v279, %v583
      %vm668 = vcmp.eq.f32.partialorder %v280, %v584
      %vm669 = vcmp.eq.f32.partialorder %v281, %v585
      %vm670 = vcmp.eq.f32.partialorder %v282, %v582
      %vm671 = vcmp.eq.f32.partialorder %v283, %v583
      %vm672 = vcmp.eq.f32.partialorder %v284, %v584
      %vm673 = vcmp.eq.f32.partialorder %v285, %v585
      %vm674 = vcmp.eq.f32.partialorder %v286, %v582
      %vm675 = vcmp.eq.f32.partialorder %v287, %v583
      %vm676 = vcmp.eq.f32.partialorder %v288, %v584
      %vm677 = vcmp.eq.f32.partialorder %v289, %v585
      %vm678 = vcmp.eq.f32.partialorder %v290, %v582
      %vm679 = vcmp.eq.f32.partialorder %v291, %v583
      %vm680 = vcmp.eq.f32.partialorder %v292, %v584
      %vm681 = vcmp.eq.f32.partialorder %v293, %v585
      %vm682 = vcmp.eq.f32.partialorder %v294, %v582
      %vm683 = vcmp.eq.f32.partialorder %v295, %v583
      %vm684 = vcmp.eq.f32.partialorder %v296, %v584
      %vm685 = vcmp.eq.f32.partialorder %v297, %v585
      %vm686 = vcmp.eq.f32.partialorder %v298, %v582
      %vm687 = vcmp.eq.f32.partialorder %v299, %v583
      %vm688 = vcmp.eq.f32.partialorder %v300, %v584
      %vm689 = vcmp.eq.f32.partialorder %v301, %v585
      %vm690 = vcmp.eq.f32.partialorder %v302, %v582
      %vm691 = vcmp.eq.f32.partialorder %v303, %v583
      %vm692 = vcmp.eq.f32.partialorder %v304, %v584
      %vm693 = vcmp.eq.f32.partialorder %v305, %v585
      %vm694 = vcmp.eq.f32.partialorder %v306, %v582
      %vm695 = vcmp.eq.f32.partialorder %v307, %v583
      %vm696 = vcmp.eq.f32.partialorder %v308, %v584
      %vm697 = vcmp.eq.f32.partialorder %v309, %v585
      %vm698 = vcmp.eq.f32.partialorder %v310, %v582
      %vm699 = vcmp.eq.f32.partialorder %v311, %v583
      %vm700 = vcmp.eq.f32.partialorder %v312, %v584
      %vm701 = vcmp.eq.f32.partialorder %v313, %v585
      %vm702 = vcmp.eq.f32.partialorder %v314, %v582
      %vm703 = vcmp.eq.f32.partialorder %v315, %v583
      %vm704 = vcmp.eq.f32.partialorder %v316, %v584
      %vm705 = vcmp.eq.f32.partialorder %v317, %v585
      %vm706 = vcmp.eq.f32.partialorder %v318, %v582
      %vm707 = vcmp.eq.f32.partialorder %v319, %v583
      %vm708 = vcmp.eq.f32.partialorder %v320, %v584
      %vm709 = vcmp.eq.f32.partialorder %v321, %v585
      %vm710 = vcmp.eq.f32.partialorder %v322, %v582
      %vm711 = vcmp.eq.f32.partialorder %v323, %v583
      %vm712 = vcmp.eq.f32.partialorder %v324, %v584
      %vm713 = vcmp.eq.f32.partialorder %v325, %v585
      %vm714 = vcmp.eq.f32.partialorder %v326, %v582
      %vm715 = vcmp.eq.f32.partialorder %v327, %v583
      %vm716 = vcmp.eq.f32.partialorder %v328, %v584
      %vm717 = vcmp.eq.f32.partialorder %v329, %v585
      %vm718 = vcmp.eq.f32.partialorder %v330, %v582
      %vm719 = vcmp.eq.f32.partialorder %v331, %v583
      %vm720 = vcmp.eq.f32.partialorder %v332, %v584
      %vm721 = vcmp.eq.f32.partialorder %v333, %v585
      %vm722 = vcmp.eq.f32.partialorder %v334, %v582
      %vm723 = vcmp.eq.f32.partialorder %v335, %v583
      %vm724 = vcmp.eq.f32.partialorder %v336, %v584
      %vm725 = vcmp.eq.f32.partialorder %v337, %v585
      %vm726 = vcmp.eq.f32.partialorder %v338, %v582
      %vm727 = vcmp.eq.f32.partialorder %v339, %v583
      %vm728 = vcmp.eq.f32.partialorder %v340, %v584
      %vm729 = vcmp.eq.f32.partialorder %v341, %v585
      %vm730 = vcmp.eq.f32.partialorder %v342, %v582
      %vm731 = vcmp.eq.f32.partialorder %v343, %v583
      %vm732 = vcmp.eq.f32.partialorder %v344, %v584
      %vm733 = vcmp.eq.f32.partialorder %v345, %v585
      %vm734 = vcmp.eq.f32.partialorder %v346, %v582
      %vm735 = vcmp.eq.f32.partialorder %v347, %v583
      %vm736 = vcmp.eq.f32.partialorder %v348, %v584
      %vm737 = vcmp.eq.f32.partialorder %v349, %v585
      %vm738 = vcmp.eq.f32.partialorder %v350, %v582
      %vm739 = vcmp.eq.f32.partialorder %v351, %v583
      %vm740 = vcmp.eq.f32.partialorder %v352, %v584
      %vm741 = vcmp.eq.f32.partialorder %v353, %v585
      %vm742 = vcmp.eq.f32.partialorder %v354, %v582
      %vm743 = vcmp.eq.f32.partialorder %v355, %v583
      %vm744 = vcmp.eq.f32.partialorder %v356, %v584
      %vm745 = vcmp.eq.f32.partialorder %v357, %v585
      %vm746 = vcmp.eq.f32.partialorder %v358, %v582
      %vm747 = vcmp.eq.f32.partialorder %v359, %v583
      %vm748 = vcmp.eq.f32.partialorder %v360, %v584
      %vm749 = vcmp.eq.f32.partialorder %v361, %v585
      %vm750 = vcmp.eq.f32.partialorder %v362, %v582
      %vm751 = vcmp.eq.f32.partialorder %v363, %v583
      %vm752 = vcmp.eq.f32.partialorder %v364, %v584
      %vm753 = vcmp.eq.f32.partialorder %v365, %v585
      %vm754 = vcmp.eq.f32.partialorder %v366, %v582
      %vm755 = vcmp.eq.f32.partialorder %v367, %v583
      %vm756 = vcmp.eq.f32.partialorder %v368, %v584
      %vm757 = vcmp.eq.f32.partialorder %v369, %v585
      %vm758 = vcmp.eq.f32.partialorder %v370, %v582
      %vm759 = vcmp.eq.f32.partialorder %v371, %v583
      %vm760 = vcmp.eq.f32.partialorder %v372, %v584
      %vm761 = vcmp.eq.f32.partialorder %v373, %v585
      %vm762 = vcmp.eq.f32.partialorder %v374, %v582
      %vm763 = vcmp.eq.f32.partialorder %v375, %v583
      %vm764 = vcmp.eq.f32.partialorder %v376, %v584
      %vm765 = vcmp.eq.f32.partialorder %v377, %v585
      %vm766 = vcmp.eq.f32.partialorder %v378, %v582
      %vm767 = vcmp.eq.f32.partialorder %v379, %v583
      %vm768 = vcmp.eq.f32.partialorder %v380, %v584
      %vm769 = vcmp.eq.f32.partialorder %v381, %v585
      %vm770 = vcmp.eq.f32.partialorder %v382, %v582
      %vm771 = vcmp.eq.f32.partialorder %v383, %v583
      %vm772 = vcmp.eq.f32.partialorder %v384, %v584
      %vm773 = vcmp.eq.f32.partialorder %v385, %v585
      %vm774 = vcmp.eq.f32.partialorder %v386, %v582
      %vm775 = vcmp.eq.f32.partialorder %v387, %v583
      %vm776 = vcmp.eq.f32.partialorder %v388, %v584
      %vm777 = vcmp.eq.f32.partialorder %v389, %v585
      %vm778 = vcmp.eq.f32.partialorder %v390, %v582
      %vm779 = vcmp.eq.f32.partialorder %v391, %v583
      %vm780 = vcmp.eq.f32.partialorder %v392, %v584
      %vm781 = vcmp.eq.f32.partialorder %v393, %v585
      %vm782 = vcmp.eq.f32.partialorder %v394, %v582
      %vm783 = vcmp.eq.f32.partialorder %v395, %v583
      %vm784 = vcmp.eq.f32.partialorder %v396, %v584
      %vm785 = vcmp.eq.f32.partialorder %v397, %v585
      %vm786 = vcmp.eq.f32.partialorder %v398, %v582
      %vm787 = vcmp.eq.f32.partialorder %v399, %v583
      %vm788 = vcmp.eq.f32.partialorder %v400, %v584
      %vm789 = vcmp.eq.f32.partialorder %v401, %v585
      %vm790 = vcmp.eq.f32.partialorder %v402, %v582
      %vm791 = vcmp.eq.f32.partialorder %v403, %v583
      %vm792 = vcmp.eq.f32.partialorder %v404, %v584
      %vm793 = vcmp.eq.f32.partialorder %v405, %v585
      %vm794 = vcmp.eq.f32.partialorder %v406, %v582
      %vm795 = vcmp.eq.f32.partialorder %v407, %v583
      %vm796 = vcmp.eq.f32.partialorder %v408, %v584
      %vm797 = vcmp.eq.f32.partialorder %v409, %v585
      %vm798 = vcmp.eq.f32.partialorder %v410, %v582
      %vm799 = vcmp.eq.f32.partialorder %v411, %v583
      %vm800 = vcmp.eq.f32.partialorder %v412, %v584
      %vm801 = vcmp.eq.f32.partialorder %v413, %v585
      %vm802 = vcmp.eq.f32.partialorder %v414, %v582
      %vm803 = vcmp.eq.f32.partialorder %v415, %v583
      %vm804 = vcmp.eq.f32.partialorder %v416, %v584
      %vm805 = vcmp.eq.f32.partialorder %v417, %v585
      %vm806 = vcmp.eq.f32.partialorder %v418, %v582
      %vm807 = vcmp.eq.f32.partialorder %v419, %v583
      %vm808 = vcmp.eq.f32.partialorder %v420, %v584
      %vm809 = vcmp.eq.f32.partialorder %v421, %v585
      %vm810 = vcmp.eq.f32.partialorder %v422, %v582
      %vm811 = vcmp.eq.f32.partialorder %v423, %v583
      %vm812 = vcmp.eq.f32.partialorder %v424, %v584
      %vm813 = vcmp.eq.f32.partialorder %v425, %v585
      %vm814 = vcmp.eq.f32.partialorder %v426, %v582
      %vm815 = vcmp.eq.f32.partialorder %v427, %v583
      %vm816 = vcmp.eq.f32.partialorder %v428, %v584
      %vm817 = vcmp.eq.f32.partialorder %v429, %v585
      %vm818 = vcmp.eq.f32.partialorder %v430, %v582
      %vm819 = vcmp.eq.f32.partialorder %v431, %v583
      %vm820 = vcmp.eq.f32.partialorder %v432, %v584
      %vm821 = vcmp.eq.f32.partialorder %v433, %v585
      %vm822 = vcmp.eq.f32.partialorder %v434, %v582
      %vm823 = vcmp.eq.f32.partialorder %v435, %v583
      %vm824 = vcmp.eq.f32.partialorder %v436, %v584
      %vm825 = vcmp.eq.f32.partialorder %v437, %v585
      %vm826 = vcmp.eq.f32.partialorder %v438, %v582
      %vm827 = vcmp.eq.f32.partialorder %v439, %v583
      %vm828 = vcmp.eq.f32.partialorder %v440, %v584
      %vm829 = vcmp.eq.f32.partialorder %v441, %v585
      %vm830 = vcmp.eq.f32.partialorder %v442, %v582
      %vm831 = vcmp.eq.f32.partialorder %v443, %v583
      %vm832 = vcmp.eq.f32.partialorder %v444, %v584
      %vm833 = vcmp.eq.f32.partialorder %v445, %v585
      %vm834 = vcmp.eq.f32.partialorder %v446, %v582
      %vm835 = vcmp.eq.f32.partialorder %v447, %v583
      %vm836 = vcmp.eq.f32.partialorder %v448, %v584
      %vm837 = vcmp.eq.f32.partialorder %v449, %v585
      %vm838 = vcmp.eq.f32.partialorder %v450, %v582
      %vm839 = vcmp.eq.f32.partialorder %v451, %v583
      %vm840 = vcmp.eq.f32.partialorder %v452, %v584
      %vm841 = vcmp.eq.f32.partialorder %v453, %v585
      %vm842 = vcmp.eq.f32.partialorder %v454, %v582
      %vm843 = vcmp.eq.f32.partialorder %v455, %v583
      %vm844 = vcmp.eq.f32.partialorder %v456, %v584
      %vm845 = vcmp.eq.f32.partialorder %v457, %v585
      %vm846 = vcmp.eq.f32.partialorder %v458, %v582
      %vm847 = vcmp.eq.f32.partialorder %v459, %v583
      %vm848 = vcmp.eq.f32.partialorder %v460, %v584
      %vm849 = vcmp.eq.f32.partialorder %v461, %v585
      %vm850 = vcmp.eq.f32.partialorder %v462, %v582
      %vm851 = vcmp.eq.f32.partialorder %v463, %v583
      %vm852 = vcmp.eq.f32.partialorder %v464, %v584
      %vm853 = vcmp.eq.f32.partialorder %v465, %v585
      %vm854 = vcmp.eq.f32.partialorder %v466, %v582
      %vm855 = vcmp.eq.f32.partialorder %v467, %v583
      %vm856 = vcmp.eq.f32.partialorder %v468, %v584
      %vm857 = vcmp.eq.f32.partialorder %v469, %v585
      %vm858 = vcmp.eq.f32.partialorder %v470, %v582
      %vm859 = vcmp.eq.f32.partialorder %v471, %v583
      %vm860 = vcmp.eq.f32.partialorder %v472, %v584
      %vm861 = vcmp.eq.f32.partialorder %v473, %v585
      %vm862 = vcmp.eq.f32.partialorder %v474, %v582
      %vm863 = vcmp.eq.f32.partialorder %v475, %v583
      %vm864 = vcmp.eq.f32.partialorder %v476, %v584
      %vm865 = vcmp.eq.f32.partialorder %v477, %v585
      %vm866 = vcmp.eq.f32.partialorder %v478, %v582
      %vm867 = vcmp.eq.f32.partialorder %v479, %v583
      %vm868 = vcmp.eq.f32.partialorder %v480, %v584
      %vm869 = vcmp.eq.f32.partialorder %v481, %v585
      %vm870 = vcmp.eq.f32.partialorder %v482, %v582
      %vm871 = vcmp.eq.f32.partialorder %v483, %v583
      %vm872 = vcmp.eq.f32.partialorder %v484, %v584
      %vm873 = vcmp.eq.f32.partialorder %v485, %v585
      %vm874 = vcmp.eq.f32.partialorder %v486, %v582
      %vm875 = vcmp.eq.f32.partialorder %v487, %v583
      %vm876 = vcmp.eq.f32.partialorder %v488, %v584
      %vm877 = vcmp.eq.f32.partialorder %v489, %v585
      %vm878 = vcmp.eq.f32.partialorder %v490, %v582
      %vm879 = vcmp.eq.f32.partialorder %v491, %v583
      %vm880 = vcmp.eq.f32.partialorder %v492, %v584
      %vm881 = vcmp.eq.f32.partialorder %v493, %v585
      %vm882 = vcmp.eq.f32.partialorder %v494, %v582
      %vm883 = vcmp.eq.f32.partialorder %v495, %v583
      %vm884 = vcmp.eq.f32.partialorder %v496, %v584
      %vm885 = vcmp.eq.f32.partialorder %v497, %v585
      %vm886 = vcmp.eq.f32.partialorder %v498, %v582
      %vm887 = vcmp.eq.f32.partialorder %v499, %v583
      %vm888 = vcmp.eq.f32.partialorder %v500, %v584
      %vm889 = vcmp.eq.f32.partialorder %v501, %v585
      %vm890 = vcmp.eq.f32.partialorder %v502, %v582
      %vm891 = vcmp.eq.f32.partialorder %v503, %v583
      %vm892 = vcmp.eq.f32.partialorder %v504, %v584
      %vm893 = vcmp.eq.f32.partialorder %v505, %v585
      %vm894 = vcmp.eq.f32.partialorder %v506, %v582
      %vm895 = vcmp.eq.f32.partialorder %v507, %v583
      %vm896 = vcmp.eq.f32.partialorder %v508, %v584
      %vm897 = vcmp.eq.f32.partialorder %v509, %v585
      %vm898 = vcmp.eq.f32.partialorder %v510, %v582
      %vm899 = vcmp.eq.f32.partialorder %v511, %v583
      %vm900 = vcmp.eq.f32.partialorder %v512, %v584
      %vm901 = vcmp.eq.f32.partialorder %v513, %v585
      %vm902 = vcmp.eq.f32.partialorder %v514, %v582
      %vm903 = vcmp.eq.f32.partialorder %v515, %v583
      %vm904 = vcmp.eq.f32.partialorder %v516, %v584
      %vm905 = vcmp.eq.f32.partialorder %v517, %v585
      %vm906 = vcmp.eq.f32.partialorder %v518, %v582
      %vm907 = vcmp.eq.f32.partialorder %v519, %v583
      %vm908 = vcmp.eq.f32.partialorder %v520, %v584
      %vm909 = vcmp.eq.f32.partialorder %v521, %v585
      %vm910 = vcmp.eq.f32.partialorder %v522, %v582
      %vm911 = vcmp.eq.f32.partialorder %v523, %v583
      %vm912 = vcmp.eq.f32.partialorder %v524, %v584
      %vm913 = vcmp.eq.f32.partialorder %v525, %v585
      %vm914 = vcmp.eq.f32.partialorder %v526, %v582
      %vm915 = vcmp.eq.f32.partialorder %v527, %v583
      %vm916 = vcmp.eq.f32.partialorder %v528, %v584
      %vm917 = vcmp.eq.f32.partialorder %v529, %v585
      %vm918 = vcmp.eq.f32.partialorder %v530, %v582
      %vm919 = vcmp.eq.f32.partialorder %v531, %v583
      %vm920 = vcmp.eq.f32.partialorder %v532, %v584
      %vm921 = vcmp.eq.f32.partialorder %v533, %v585
      %vm922 = vcmp.eq.f32.partialorder %v534, %v582
      %vm923 = vcmp.eq.f32.partialorder %v535, %v583
      %vm924 = vcmp.eq.f32.partialorder %v536, %v584
      %vm925 = vcmp.eq.f32.partialorder %v537, %v585
      %vm926 = vcmp.eq.f32.partialorder %v538, %v582
      %vm927 = vcmp.eq.f32.partialorder %v539, %v583
      %vm928 = vcmp.eq.f32.partialorder %v540, %v584
      %vm929 = vcmp.eq.f32.partialorder %v541, %v585
      %vm930 = vcmp.eq.f32.partialorder %v542, %v582
      %vm931 = vcmp.eq.f32.partialorder %v543, %v583
      %vm932 = vcmp.eq.f32.partialorder %v544, %v584
      %vm933 = vcmp.eq.f32.partialorder %v545, %v585
      %vm934 = vcmp.eq.f32.partialorder %v546, %v582
      %vm935 = vcmp.eq.f32.partialorder %v547, %v583
      %vm936 = vcmp.eq.f32.partialorder %v548, %v584
      %vm937 = vcmp.eq.f32.partialorder %v549, %v585
      %vm938 = vcmp.eq.f32.partialorder %v550, %v582
      %vm939 = vcmp.eq.f32.partialorder %v551, %v583
      %vm940 = vcmp.eq.f32.partialorder %v552, %v584
      %vm941 = vcmp.eq.f32.partialorder %v553, %v585
      %vm942 = vcmp.eq.f32.partialorder %v554, %v582
      %vm943 = vcmp.eq.f32.partialorder %v555, %v583
      %vm944 = vcmp.eq.f32.partialorder %v556, %v584
      %vm945 = vcmp.eq.f32.partialorder %v557, %v585
      %vm946 = vcmp.eq.f32.partialorder %v558, %v582
      %vm947 = vcmp.eq.f32.partialorder %v559, %v583
      %vm948 = vcmp.eq.f32.partialorder %v560, %v584
      %vm949 = vcmp.eq.f32.partialorder %v561, %v585
      %vm950 = vcmp.eq.f32.partialorder %v562, %v582
      %vm951 = vcmp.eq.f32.partialorder %v563, %v583
      %vm952 = vcmp.eq.f32.partialorder %v564, %v584
      %vm953 = vcmp.eq.f32.partialorder %v565, %v585
      %vm954 = vcmp.eq.f32.partialorder %v566, %v582
      %vm955 = vcmp.eq.f32.partialorder %v567, %v583
      %vm956 = vcmp.eq.f32.partialorder %v568, %v584
      %vm957 = vcmp.eq.f32.partialorder %v569, %v585
      %vm958 = vcmp.eq.f32.partialorder %v570, %v582
      %vm959 = vcmp.eq.f32.partialorder %v571, %v583
      %vm960 = vcmp.eq.f32.partialorder %v572, %v584
      %vm961 = vcmp.eq.f32.partialorder %v573, %v585
      %vm962 = vcmp.eq.f32.partialorder %v574, %v582
      %vm963 = vcmp.eq.f32.partialorder %v575, %v583
      %vm964 = vcmp.eq.f32.partialorder %v576, %v584
      %vm965 = vcmp.eq.f32.partialorder %v577, %v585
      %vm966 = vcmp.eq.f32.partialorder %v578, %v582
      %vm967 = vcmp.eq.f32.partialorder %v579, %v583
      %vm968 = vcmp.eq.f32.partialorder %v580, %v584
      %vm969 = vcmp.eq.f32.partialorder %v581, %v585
      %v970 = vadd.f32 %v194, 1.0
      %v971 = vadd.f32 %v195, 1.0
      %v972 = vadd.f32 %v196, 1.0
      %v973 = vadd.f32 %v197, 1.0
      %v974 = vperm.slane %v970, 0
      %v975 = vperm.slane %v971, 0
      %v976 = vperm.slane %v972, 0
      %v977 = vperm.slane %v973, 0
      %vm978 = vcmp.eq.f32.partialorder %v198, %v974
      %vm979 = vcmp.eq.f32.partialorder %v199, %v975
      %vm980 = vcmp.eq.f32.partialorder %v200, %v976
      %vm981 = vcmp.eq.f32.partialorder %v201, %v977
      %vm982 = vcmp.eq.f32.partialorder %v202, %v974
      %vm983 = vcmp.eq.f32.partialorder %v203, %v975
      %vm984 = vcmp.eq.f32.partialorder %v204, %v976
      %vm985 = vcmp.eq.f32.partialorder %v205, %v977
      %vm986 = vcmp.eq.f32.partialorder %v206, %v974
      %vm987 = vcmp.eq.f32.partialorder %v207, %v975
      %vm988 = vcmp.eq.f32.partialorder %v208, %v976
      %vm989 = vcmp.eq.f32.partialorder %v209, %v977
      %vm990 = vcmp.eq.f32.partialorder %v210, %v974
      %vm991 = vcmp.eq.f32.partialorder %v211, %v975
      %vm992 = vcmp.eq.f32.partialorder %v212, %v976
      %vm993 = vcmp.eq.f32.partialorder %v213, %v977
      %vm994 = vcmp.eq.f32.partialorder %v214, %v974
      %vm995 = vcmp.eq.f32.partialorder %v215, %v975
      %vm996 = vcmp.eq.f32.partialorder %v216, %v976
      %vm997 = vcmp.eq.f32.partialorder %v217, %v977
      %vm998 = vcmp.eq.f32.partialorder %v218, %v974
      %vm999 = vcmp.eq.f32.partialorder %v219, %v975
      %vm1000 = vcmp.eq.f32.partialorder %v220, %v976
      %vm1001 = vcmp.eq.f32.partialorder %v221, %v977
      %vm1002 = vcmp.eq.f32.partialorder %v222, %v974
      %vm1003 = vcmp.eq.f32.partialorder %v223, %v975
      %vm1004 = vcmp.eq.f32.partialorder %v224, %v976
      %vm1005 = vcmp.eq.f32.partialorder %v225, %v977
      %vm1006 = vcmp.eq.f32.partialorder %v226, %v974
      %vm1007 = vcmp.eq.f32.partialorder %v227, %v975
      %vm1008 = vcmp.eq.f32.partialorder %v228, %v976
      %vm1009 = vcmp.eq.f32.partialorder %v229, %v977
      %vm1010 = vcmp.eq.f32.partialorder %v230, %v974
      %vm1011 = vcmp.eq.f32.partialorder %v231, %v975
      %vm1012 = vcmp.eq.f32.partialorder %v232, %v976
      %vm1013 = vcmp.eq.f32.partialorder %v233, %v977
      %vm1014 = vcmp.eq.f32.partialorder %v234, %v974
      %vm1015 = vcmp.eq.f32.partialorder %v235, %v975
      %vm1016 = vcmp.eq.f32.partialorder %v236, %v976
      %vm1017 = vcmp.eq.f32.partialorder %v237, %v977
      %vm1018 = vcmp.eq.f32.partialorder %v238, %v974
      %vm1019 = vcmp.eq.f32.partialorder %v239, %v975
      %vm1020 = vcmp.eq.f32.partialorder %v240, %v976
      %vm1021 = vcmp.eq.f32.partialorder %v241, %v977
      %vm1022 = vcmp.eq.f32.partialorder %v242, %v974
      %vm1023 = vcmp.eq.f32.partialorder %v243, %v975
      %vm1024 = vcmp.eq.f32.partialorder %v244, %v976
      %vm1025 = vcmp.eq.f32.partialorder %v245, %v977
      %vm1026 = vcmp.eq.f32.partialorder %v246, %v974
      %vm1027 = vcmp.eq.f32.partialorder %v247, %v975
      %vm1028 = vcmp.eq.f32.partialorder %v248, %v976
      %vm1029 = vcmp.eq.f32.partialorder %v249, %v977
      %vm1030 = vcmp.eq.f32.partialorder %v250, %v974
      %vm1031 = vcmp.eq.f32.partialorder %v251, %v975
      %vm1032 = vcmp.eq.f32.partialorder %v252, %v976
      %vm1033 = vcmp.eq.f32.partialorder %v253, %v977
      %vm1034 = vcmp.eq.f32.partialorder %v254, %v974
      %vm1035 = vcmp.eq.f32.partialorder %v255, %v975
      %vm1036 = vcmp.eq.f32.partialorder %v256, %v976
      %vm1037 = vcmp.eq.f32.partialorder %v257, %v977
      %vm1038 = vcmp.eq.f32.partialorder %v258, %v974
      %vm1039 = vcmp.eq.f32.partialorder %v259, %v975
      %vm1040 = vcmp.eq.f32.partialorder %v260, %v976
      %vm1041 = vcmp.eq.f32.partialorder %v261, %v977
      %vm1042 = vcmp.eq.f32.partialorder %v262, %v974
      %vm1043 = vcmp.eq.f32.partialorder %v263, %v975
      %vm1044 = vcmp.eq.f32.partialorder %v264, %v976
      %vm1045 = vcmp.eq.f32.partialorder %v265, %v977
      %vm1046 = vcmp.eq.f32.partialorder %v266, %v974
      %vm1047 = vcmp.eq.f32.partialorder %v267, %v975
      %vm1048 = vcmp.eq.f32.partialorder %v268, %v976
      %vm1049 = vcmp.eq.f32.partialorder %v269, %v977
      %vm1050 = vcmp.eq.f32.partialorder %v270, %v974
      %vm1051 = vcmp.eq.f32.partialorder %v271, %v975
      %vm1052 = vcmp.eq.f32.partialorder %v272, %v976
      %vm1053 = vcmp.eq.f32.partialorder %v273, %v977
      %vm1054 = vcmp.eq.f32.partialorder %v274, %v974
      %vm1055 = vcmp.eq.f32.partialorder %v275, %v975
      %vm1056 = vcmp.eq.f32.partialorder %v276, %v976
      %vm1057 = vcmp.eq.f32.partialorder %v277, %v977
      %vm1058 = vcmp.eq.f32.partialorder %v278, %v974
      %vm1059 = vcmp.eq.f32.partialorder %v279, %v975
      %vm1060 = vcmp.eq.f32.partialorder %v280, %v976
      %vm1061 = vcmp.eq.f32.partialorder %v281, %v977
      %vm1062 = vcmp.eq.f32.partialorder %v282, %v974
      %vm1063 = vcmp.eq.f32.partialorder %v283, %v975
      %vm1064 = vcmp.eq.f32.partialorder %v284, %v976
      %vm1065 = vcmp.eq.f32.partialorder %v285, %v977
      %vm1066 = vcmp.eq.f32.partialorder %v286, %v974
      %vm1067 = vcmp.eq.f32.partialorder %v287, %v975
      %vm1068 = vcmp.eq.f32.partialorder %v288, %v976
      %vm1069 = vcmp.eq.f32.partialorder %v289, %v977
      %vm1070 = vcmp.eq.f32.partialorder %v290, %v974
      %vm1071 = vcmp.eq.f32.partialorder %v291, %v975
      %vm1072 = vcmp.eq.f32.partialorder %v292, %v976
      %vm1073 = vcmp.eq.f32.partialorder %v293, %v977
      %vm1074 = vcmp.eq.f32.partialorder %v294, %v974
      %vm1075 = vcmp.eq.f32.partialorder %v295, %v975
      %vm1076 = vcmp.eq.f32.partialorder %v296, %v976
      %vm1077 = vcmp.eq.f32.partialorder %v297, %v977
      %vm1078 = vcmp.eq.f32.partialorder %v298, %v974
      %vm1079 = vcmp.eq.f32.partialorder %v299, %v975
      %vm1080 = vcmp.eq.f32.partialorder %v300, %v976
      %vm1081 = vcmp.eq.f32.partialorder %v301, %v977
      %vm1082 = vcmp.eq.f32.partialorder %v302, %v974
      %vm1083 = vcmp.eq.f32.partialorder %v303, %v975
      %vm1084 = vcmp.eq.f32.partialorder %v304, %v976
      %vm1085 = vcmp.eq.f32.partialorder %v305, %v977
      %vm1086 = vcmp.eq.f32.partialorder %v306, %v974
      %vm1087 = vcmp.eq.f32.partialorder %v307, %v975
      %vm1088 = vcmp.eq.f32.partialorder %v308, %v976
      %vm1089 = vcmp.eq.f32.partialorder %v309, %v977
      %vm1090 = vcmp.eq.f32.partialorder %v310, %v974
      %vm1091 = vcmp.eq.f32.partialorder %v311, %v975
      %vm1092 = vcmp.eq.f32.partialorder %v312, %v976
      %vm1093 = vcmp.eq.f32.partialorder %v313, %v977
      %vm1094 = vcmp.eq.f32.partialorder %v314, %v974
      %vm1095 = vcmp.eq.f32.partialorder %v315, %v975
      %vm1096 = vcmp.eq.f32.partialorder %v316, %v976
      %vm1097 = vcmp.eq.f32.partialorder %v317, %v977
      %vm1098 = vcmp.eq.f32.partialorder %v318, %v974
      %vm1099 = vcmp.eq.f32.partialorder %v319, %v975
      %vm1100 = vcmp.eq.f32.partialorder %v320, %v976
      %vm1101 = vcmp.eq.f32.partialorder %v321, %v977
      %vm1102 = vcmp.eq.f32.partialorder %v322, %v974
      %vm1103 = vcmp.eq.f32.partialorder %v323, %v975
      %vm1104 = vcmp.eq.f32.partialorder %v324, %v976
      %vm1105 = vcmp.eq.f32.partialorder %v325, %v977
      %vm1106 = vcmp.eq.f32.partialorder %v326, %v974
      %vm1107 = vcmp.eq.f32.partialorder %v327, %v975
      %vm1108 = vcmp.eq.f32.partialorder %v328, %v976
      %vm1109 = vcmp.eq.f32.partialorder %v329, %v977
      %vm1110 = vcmp.eq.f32.partialorder %v330, %v974
      %vm1111 = vcmp.eq.f32.partialorder %v331, %v975
      %vm1112 = vcmp.eq.f32.partialorder %v332, %v976
      %vm1113 = vcmp.eq.f32.partialorder %v333, %v977
      %vm1114 = vcmp.eq.f32.partialorder %v334, %v974
      %vm1115 = vcmp.eq.f32.partialorder %v335, %v975
      %vm1116 = vcmp.eq.f32.partialorder %v336, %v976
      %vm1117 = vcmp.eq.f32.partialorder %v337, %v977
      %vm1118 = vcmp.eq.f32.partialorder %v338, %v974
      %vm1119 = vcmp.eq.f32.partialorder %v339, %v975
      %vm1120 = vcmp.eq.f32.partialorder %v340, %v976
      %vm1121 = vcmp.eq.f32.partialorder %v341, %v977
      %vm1122 = vcmp.eq.f32.partialorder %v342, %v974
      %vm1123 = vcmp.eq.f32.partialorder %v343, %v975
      %vm1124 = vcmp.eq.f32.partialorder %v344, %v976
      %vm1125 = vcmp.eq.f32.partialorder %v345, %v977
      %vm1126 = vcmp.eq.f32.partialorder %v346, %v974
      %vm1127 = vcmp.eq.f32.partialorder %v347, %v975
      %vm1128 = vcmp.eq.f32.partialorder %v348, %v976
      %vm1129 = vcmp.eq.f32.partialorder %v349, %v977
      %vm1130 = vcmp.eq.f32.partialorder %v350, %v974
      %vm1131 = vcmp.eq.f32.partialorder %v351, %v975
      %vm1132 = vcmp.eq.f32.partialorder %v352, %v976
      %vm1133 = vcmp.eq.f32.partialorder %v353, %v977
      %vm1134 = vcmp.eq.f32.partialorder %v354, %v974
      %vm1135 = vcmp.eq.f32.partialorder %v355, %v975
      %vm1136 = vcmp.eq.f32.partialorder %v356, %v976
      %vm1137 = vcmp.eq.f32.partialorder %v357, %v977
      %vm1138 = vcmp.eq.f32.partialorder %v358, %v974
      %vm1139 = vcmp.eq.f32.partialorder %v359, %v975
      %vm1140 = vcmp.eq.f32.partialorder %v360, %v976
      %vm1141 = vcmp.eq.f32.partialorder %v361, %v977
      %vm1142 = vcmp.eq.f32.partialorder %v362, %v974
      %vm1143 = vcmp.eq.f32.partialorder %v363, %v975
      %vm1144 = vcmp.eq.f32.partialorder %v364, %v976
      %vm1145 = vcmp.eq.f32.partialorder %v365, %v977
      %vm1146 = vcmp.eq.f32.partialorder %v366, %v974
      %vm1147 = vcmp.eq.f32.partialorder %v367, %v975
      %vm1148 = vcmp.eq.f32.partialorder %v368, %v976
      %vm1149 = vcmp.eq.f32.partialorder %v369, %v977
      %vm1150 = vcmp.eq.f32.partialorder %v370, %v974
      %vm1151 = vcmp.eq.f32.partialorder %v371, %v975
      %vm1152 = vcmp.eq.f32.partialorder %v372, %v976
      %vm1153 = vcmp.eq.f32.partialorder %v373, %v977
      %vm1154 = vcmp.eq.f32.partialorder %v374, %v974
      %vm1155 = vcmp.eq.f32.partialorder %v375, %v975
      %vm1156 = vcmp.eq.f32.partialorder %v376, %v976
      %vm1157 = vcmp.eq.f32.partialorder %v377, %v977
      %vm1158 = vcmp.eq.f32.partialorder %v378, %v974
      %vm1159 = vcmp.eq.f32.partialorder %v379, %v975
      %vm1160 = vcmp.eq.f32.partialorder %v380, %v976
      %vm1161 = vcmp.eq.f32.partialorder %v381, %v977
      %vm1162 = vcmp.eq.f32.partialorder %v382, %v974
      %vm1163 = vcmp.eq.f32.partialorder %v383, %v975
      %vm1164 = vcmp.eq.f32.partialorder %v384, %v976
      %vm1165 = vcmp.eq.f32.partialorder %v385, %v977
      %vm1166 = vcmp.eq.f32.partialorder %v386, %v974
      %vm1167 = vcmp.eq.f32.partialorder %v387, %v975
      %vm1168 = vcmp.eq.f32.partialorder %v388, %v976
      %vm1169 = vcmp.eq.f32.partialorder %v389, %v977
      %vm1170 = vcmp.eq.f32.partialorder %v390, %v974
      %vm1171 = vcmp.eq.f32.partialorder %v391, %v975
      %vm1172 = vcmp.eq.f32.partialorder %v392, %v976
      %vm1173 = vcmp.eq.f32.partialorder %v393, %v977
      %vm1174 = vcmp.eq.f32.partialorder %v394, %v974
      %vm1175 = vcmp.eq.f32.partialorder %v395, %v975
      %vm1176 = vcmp.eq.f32.partialorder %v396, %v976
      %vm1177 = vcmp.eq.f32.partialorder %v397, %v977
      %vm1178 = vcmp.eq.f32.partialorder %v398, %v974
      %vm1179 = vcmp.eq.f32.partialorder %v399, %v975
      %vm1180 = vcmp.eq.f32.partialorder %v400, %v976
      %vm1181 = vcmp.eq.f32.partialorder %v401, %v977
      %vm1182 = vcmp.eq.f32.partialorder %v402, %v974
      %vm1183 = vcmp.eq.f32.partialorder %v403, %v975
      %vm1184 = vcmp.eq.f32.partialorder %v404, %v976
      %vm1185 = vcmp.eq.f32.partialorder %v405, %v977
      %vm1186 = vcmp.eq.f32.partialorder %v406, %v974
      %vm1187 = vcmp.eq.f32.partialorder %v407, %v975
      %vm1188 = vcmp.eq.f32.partialorder %v408, %v976
      %vm1189 = vcmp.eq.f32.partialorder %v409, %v977
      %vm1190 = vcmp.eq.f32.partialorder %v410, %v974
      %vm1191 = vcmp.eq.f32.partialorder %v411, %v975
      %vm1192 = vcmp.eq.f32.partialorder %v412, %v976
      %vm1193 = vcmp.eq.f32.partialorder %v413, %v977
      %vm1194 = vcmp.eq.f32.partialorder %v414, %v974
      %vm1195 = vcmp.eq.f32.partialorder %v415, %v975
      %vm1196 = vcmp.eq.f32.partialorder %v416, %v976
      %vm1197 = vcmp.eq.f32.partialorder %v417, %v977
      %vm1198 = vcmp.eq.f32.partialorder %v418, %v974
      %vm1199 = vcmp.eq.f32.partialorder %v419, %v975
      %vm1200 = vcmp.eq.f32.partialorder %v420, %v976
      %vm1201 = vcmp.eq.f32.partialorder %v421, %v977
      %vm1202 = vcmp.eq.f32.partialorder %v422, %v974
      %vm1203 = vcmp.eq.f32.partialorder %v423, %v975
      %vm1204 = vcmp.eq.f32.partialorder %v424, %v976
      %vm1205 = vcmp.eq.f32.partialorder %v425, %v977
      %vm1206 = vcmp.eq.f32.partialorder %v426, %v974
      %vm1207 = vcmp.eq.f32.partialorder %v427, %v975
      %vm1208 = vcmp.eq.f32.partialorder %v428, %v976
      %vm1209 = vcmp.eq.f32.partialorder %v429, %v977
      %vm1210 = vcmp.eq.f32.partialorder %v430, %v974
      %vm1211 = vcmp.eq.f32.partialorder %v431, %v975
      %vm1212 = vcmp.eq.f32.partialorder %v432, %v976
      %vm1213 = vcmp.eq.f32.partialorder %v433, %v977
      %vm1214 = vcmp.eq.f32.partialorder %v434, %v974
      %vm1215 = vcmp.eq.f32.partialorder %v435, %v975
      %vm1216 = vcmp.eq.f32.partialorder %v436, %v976
      %vm1217 = vcmp.eq.f32.partialorder %v437, %v977
      %vm1218 = vcmp.eq.f32.partialorder %v438, %v974
      %vm1219 = vcmp.eq.f32.partialorder %v439, %v975
      %vm1220 = vcmp.eq.f32.partialorder %v440, %v976
      %vm1221 = vcmp.eq.f32.partialorder %v441, %v977
      %vm1222 = vcmp.eq.f32.partialorder %v442, %v974
      %vm1223 = vcmp.eq.f32.partialorder %v443, %v975
      %vm1224 = vcmp.eq.f32.partialorder %v444, %v976
      %vm1225 = vcmp.eq.f32.partialorder %v445, %v977
      %vm1226 = vcmp.eq.f32.partialorder %v446, %v974
      %vm1227 = vcmp.eq.f32.partialorder %v447, %v975
      %vm1228 = vcmp.eq.f32.partialorder %v448, %v976
      %vm1229 = vcmp.eq.f32.partialorder %v449, %v977
      %vm1230 = vcmp.eq.f32.partialorder %v450, %v974
      %vm1231 = vcmp.eq.f32.partialorder %v451, %v975
      %vm1232 = vcmp.eq.f32.partialorder %v452, %v976
      %vm1233 = vcmp.eq.f32.partialorder %v453, %v977
      %vm1234 = vcmp.eq.f32.partialorder %v454, %v974
      %vm1235 = vcmp.eq.f32.partialorder %v455, %v975
      %vm1236 = vcmp.eq.f32.partialorder %v456, %v976
      %vm1237 = vcmp.eq.f32.partialorder %v457, %v977
      %vm1238 = vcmp.eq.f32.partialorder %v458, %v974
      %vm1239 = vcmp.eq.f32.partialorder %v459, %v975
      %vm1240 = vcmp.eq.f32.partialorder %v460, %v976
      %vm1241 = vcmp.eq.f32.partialorder %v461, %v977
      %vm1242 = vcmp.eq.f32.partialorder %v462, %v974
      %vm1243 = vcmp.eq.f32.partialorder %v463, %v975
      %vm1244 = vcmp.eq.f32.partialorder %v464, %v976
      %vm1245 = vcmp.eq.f32.partialorder %v465, %v977
      %vm1246 = vcmp.eq.f32.partialorder %v466, %v974
      %vm1247 = vcmp.eq.f32.partialorder %v467, %v975
      %vm1248 = vcmp.eq.f32.partialorder %v468, %v976
      %vm1249 = vcmp.eq.f32.partialorder %v469, %v977
      %vm1250 = vcmp.eq.f32.partialorder %v470, %v974
      %vm1251 = vcmp.eq.f32.partialorder %v471, %v975
      %vm1252 = vcmp.eq.f32.partialorder %v472, %v976
      %vm1253 = vcmp.eq.f32.partialorder %v473, %v977
      %vm1254 = vcmp.eq.f32.partialorder %v474, %v974
      %vm1255 = vcmp.eq.f32.partialorder %v475, %v975
      %vm1256 = vcmp.eq.f32.partialorder %v476, %v976
      %vm1257 = vcmp.eq.f32.partialorder %v477, %v977
      %vm1258 = vcmp.eq.f32.partialorder %v478, %v974
      %vm1259 = vcmp.eq.f32.partialorder %v479, %v975
      %vm1260 = vcmp.eq.f32.partialorder %v480, %v976
      %vm1261 = vcmp.eq.f32.partialorder %v481, %v977
      %vm1262 = vcmp.eq.f32.partialorder %v482, %v974
      %vm1263 = vcmp.eq.f32.partialorder %v483, %v975
      %vm1264 = vcmp.eq.f32.partialorder %v484, %v976
      %vm1265 = vcmp.eq.f32.partialorder %v485, %v977
      %vm1266 = vcmp.eq.f32.partialorder %v486, %v974
      %vm1267 = vcmp.eq.f32.partialorder %v487, %v975
      %vm1268 = vcmp.eq.f32.partialorder %v488, %v976
      %vm1269 = vcmp.eq.f32.partialorder %v489, %v977
      %vm1270 = vcmp.eq.f32.partialorder %v490, %v974
      %vm1271 = vcmp.eq.f32.partialorder %v491, %v975
      %vm1272 = vcmp.eq.f32.partialorder %v492, %v976
      %vm1273 = vcmp.eq.f32.partialorder %v493, %v977
      %vm1274 = vcmp.eq.f32.partialorder %v494, %v974
      %vm1275 = vcmp.eq.f32.partialorder %v495, %v975
      %vm1276 = vcmp.eq.f32.partialorder %v496, %v976
      %vm1277 = vcmp.eq.f32.partialorder %v497, %v977
      %vm1278 = vcmp.eq.f32.partialorder %v498, %v974
      %vm1279 = vcmp.eq.f32.partialorder %v499, %v975
      %vm1280 = vcmp.eq.f32.partialorder %v500, %v976
      %vm1281 = vcmp.eq.f32.partialorder %v501, %v977
      %vm1282 = vcmp.eq.f32.partialorder %v502, %v974
      %vm1283 = vcmp.eq.f32.partialorder %v503, %v975
      %vm1284 = vcmp.eq.f32.partialorder %v504, %v976
      %vm1285 = vcmp.eq.f32.partialorder %v505, %v977
      %vm1286 = vcmp.eq.f32.partialorder %v506, %v974
      %vm1287 = vcmp.eq.f32.partialorder %v507, %v975
      %vm1288 = vcmp.eq.f32.partialorder %v508, %v976
      %vm1289 = vcmp.eq.f32.partialorder %v509, %v977
      %vm1290 = vcmp.eq.f32.partialorder %v510, %v974
      %vm1291 = vcmp.eq.f32.partialorder %v511, %v975
      %vm1292 = vcmp.eq.f32.partialorder %v512, %v976
      %vm1293 = vcmp.eq.f32.partialorder %v513, %v977
      %vm1294 = vcmp.eq.f32.partialorder %v514, %v974
      %vm1295 = vcmp.eq.f32.partialorder %v515, %v975
      %vm1296 = vcmp.eq.f32.partialorder %v516, %v976
      %vm1297 = vcmp.eq.f32.partialorder %v517, %v977
      %vm1298 = vcmp.eq.f32.partialorder %v518, %v974
      %vm1299 = vcmp.eq.f32.partialorder %v519, %v975
      %vm1300 = vcmp.eq.f32.partialorder %v520, %v976
      %vm1301 = vcmp.eq.f32.partialorder %v521, %v977
      %vm1302 = vcmp.eq.f32.partialorder %v522, %v974
      %vm1303 = vcmp.eq.f32.partialorder %v523, %v975
      %vm1304 = vcmp.eq.f32.partialorder %v524, %v976
      %vm1305 = vcmp.eq.f32.partialorder %v525, %v977
      %vm1306 = vcmp.eq.f32.partialorder %v526, %v974
      %vm1307 = vcmp.eq.f32.partialorder %v527, %v975
      %vm1308 = vcmp.eq.f32.partialorder %v528, %v976
      %vm1309 = vcmp.eq.f32.partialorder %v529, %v977
      %vm1310 = vcmp.eq.f32.partialorder %v530, %v974
      %vm1311 = vcmp.eq.f32.partialorder %v531, %v975
      %vm1312 = vcmp.eq.f32.partialorder %v532, %v976
      %vm1313 = vcmp.eq.f32.partialorder %v533, %v977
      %vm1314 = vcmp.eq.f32.partialorder %v534, %v974
      %vm1315 = vcmp.eq.f32.partialorder %v535, %v975
      %vm1316 = vcmp.eq.f32.partialorder %v536, %v976
      %vm1317 = vcmp.eq.f32.partialorder %v537, %v977
      %vm1318 = vcmp.eq.f32.partialorder %v538, %v974
      %vm1319 = vcmp.eq.f32.partialorder %v539, %v975
      %vm1320 = vcmp.eq.f32.partialorder %v540, %v976
      %vm1321 = vcmp.eq.f32.partialorder %v541, %v977
      %vm1322 = vcmp.eq.f32.partialorder %v542, %v974
      %vm1323 = vcmp.eq.f32.partialorder %v543, %v975
      %vm1324 = vcmp.eq.f32.partialorder %v544, %v976
      %vm1325 = vcmp.eq.f32.partialorder %v545, %v977
      %vm1326 = vcmp.eq.f32.partialorder %v546, %v974
      %vm1327 = vcmp.eq.f32.partialorder %v547, %v975
      %vm1328 = vcmp.eq.f32.partialorder %v548, %v976
      %vm1329 = vcmp.eq.f32.partialorder %v549, %v977
      %vm1330 = vcmp.eq.f32.partialorder %v550, %v974
      %vm1331 = vcmp.eq.f32.partialorder %v551, %v975
      %vm1332 = vcmp.eq.f32.partialorder %v552, %v976
      %vm1333 = vcmp.eq.f32.partialorder %v553, %v977
      %vm1334 = vcmp.eq.f32.partialorder %v554, %v974
      %vm1335 = vcmp.eq.f32.partialorder %v555, %v975
      %vm1336 = vcmp.eq.f32.partialorder %v556, %v976
      %vm1337 = vcmp.eq.f32.partialorder %v557, %v977
      %vm1338 = vcmp.eq.f32.partialorder %v558, %v974
      %vm1339 = vcmp.eq.f32.partialorder %v559, %v975
      %vm1340 = vcmp.eq.f32.partialorder %v560, %v976
      %vm1341 = vcmp.eq.f32.partialorder %v561, %v977
      %vm1342 = vcmp.eq.f32.partialorder %v562, %v974
      %vm1343 = vcmp.eq.f32.partialorder %v563, %v975
      %vm1344 = vcmp.eq.f32.partialorder %v564, %v976
      %vm1345 = vcmp.eq.f32.partialorder %v565, %v977
      %vm1346 = vcmp.eq.f32.partialorder %v566, %v974
      %vm1347 = vcmp.eq.f32.partialorder %v567, %v975
      %vm1348 = vcmp.eq.f32.partialorder %v568, %v976
      %vm1349 = vcmp.eq.f32.partialorder %v569, %v977
      %vm1350 = vcmp.eq.f32.partialorder %v570, %v974
      %vm1351 = vcmp.eq.f32.partialorder %v571, %v975
      %vm1352 = vcmp.eq.f32.partialorder %v572, %v976
      %vm1353 = vcmp.eq.f32.partialorder %v573, %v977
      %vm1354 = vcmp.eq.f32.partialorder %v574, %v974
      %vm1355 = vcmp.eq.f32.partialorder %v575, %v975
      %vm1356 = vcmp.eq.f32.partialorder %v576, %v976
      %vm1357 = vcmp.eq.f32.partialorder %v577, %v977
      %vm1358 = vcmp.eq.f32.partialorder %v578, %v974
      %vm1359 = vcmp.eq.f32.partialorder %v579, %v975
      %vm1360 = vcmp.eq.f32.partialorder %v580, %v976
      %vm1361 = vcmp.eq.f32.partialorder %v581, %v977
      %v1362 = vperm.slane %v194, 2
      %v1363 = vperm.slane %v195, 2
      %v1364 = vperm.slane %v196, 2
      %v1365 = vperm.slane %v197, 2
      %v1366 = vsel %vm978, %v1362, 0.0
      %v1367 = vsel %vm979, %v1363, 0.0
      %v1368 = vsel %vm980, %v1364, 0.0
      %v1369 = vsel %vm981, %v1365, 0.0
      %v1370 = vsel %vm982, %v1362, 0.0
      %v1371 = vsel %vm983, %v1363, 0.0
      %v1372 = vsel %vm984, %v1364, 0.0
      %v1373 = vsel %vm985, %v1365, 0.0
      %v1374 = vsel %vm986, %v1362, 0.0
      %v1375 = vsel %vm987, %v1363, 0.0
      %v1376 = vsel %vm988, %v1364, 0.0
      %v1377 = vsel %vm989, %v1365, 0.0
      %v1378 = vsel %vm990, %v1362, 0.0
      %v1379 = vsel %vm991, %v1363, 0.0
      %v1380 = vsel %vm992, %v1364, 0.0
      %v1381 = vsel %vm993, %v1365, 0.0
      %v1382 = vsel %vm994, %v1362, 0.0
      %v1383 = vsel %vm995, %v1363, 0.0
      %v1384 = vsel %vm996, %v1364, 0.0
      %v1385 = vsel %vm997, %v1365, 0.0
      %v1386 = vsel %vm998, %v1362, 0.0
      %v1387 = vsel %vm999, %v1363, 0.0
      %v1388 = vsel %vm1000, %v1364, 0.0
      %v1389 = vsel %vm1001, %v1365, 0.0
      %v1390 = vsel %vm1002, %v1362, 0.0
      %v1391 = vsel %vm1003, %v1363, 0.0
      %v1392 = vsel %vm1004, %v1364, 0.0
      %v1393 = vsel %vm1005, %v1365, 0.0
      %v1394 = vsel %vm1006, %v1362, 0.0
      %v1395 = vsel %vm1007, %v1363, 0.0
      %v1396 = vsel %vm1008, %v1364, 0.0
      %v1397 = vsel %vm1009, %v1365, 0.0
      %v1398 = vsel %vm1010, %v1362, 0.0
      %v1399 = vsel %vm1011, %v1363, 0.0
      %v1400 = vsel %vm1012, %v1364, 0.0
      %v1401 = vsel %vm1013, %v1365, 0.0
      %v1402 = vsel %vm1014, %v1362, 0.0
      %v1403 = vsel %vm1015, %v1363, 0.0
      %v1404 = vsel %vm1016, %v1364, 0.0
      %v1405 = vsel %vm1017, %v1365, 0.0
      %v1406 = vsel %vm1018, %v1362, 0.0
      %v1407 = vsel %vm1019, %v1363, 0.0
      %v1408 = vsel %vm1020, %v1364, 0.0
      %v1409 = vsel %vm1021, %v1365, 0.0
      %v1410 = vsel %vm1022, %v1362, 0.0
      %v1411 = vsel %vm1023, %v1363, 0.0
      %v1412 = vsel %vm1024, %v1364, 0.0
      %v1413 = vsel %vm1025, %v1365, 0.0
      %v1414 = vsel %vm1026, %v1362, 0.0
      %v1415 = vsel %vm1027, %v1363, 0.0
      %v1416 = vsel %vm1028, %v1364, 0.0
      %v1417 = vsel %vm1029, %v1365, 0.0
      %v1418 = vsel %vm1030, %v1362, 0.0
      %v1419 = vsel %vm1031, %v1363, 0.0
      %v1420 = vsel %vm1032, %v1364, 0.0
      %v1421 = vsel %vm1033, %v1365, 0.0
      %v1422 = vsel %vm1034, %v1362, 0.0
      %v1423 = vsel %vm1035, %v1363, 0.0
      %v1424 = vsel %vm1036, %v1364, 0.0
      %v1425 = vsel %vm1037, %v1365, 0.0
      %v1426 = vsel %vm1038, %v1362, 0.0
      %v1427 = vsel %vm1039, %v1363, 0.0
      %v1428 = vsel %vm1040, %v1364, 0.0
      %v1429 = vsel %vm1041, %v1365, 0.0
      %v1430 = vsel %vm1042, %v1362, 0.0
      %v1431 = vsel %vm1043, %v1363, 0.0
      %v1432 = vsel %vm1044, %v1364, 0.0
      %v1433 = vsel %vm1045, %v1365, 0.0
      %v1434 = vsel %vm1046, %v1362, 0.0
      %v1435 = vsel %vm1047, %v1363, 0.0
      %v1436 = vsel %vm1048, %v1364, 0.0
      %v1437 = vsel %vm1049, %v1365, 0.0
      %v1438 = vsel %vm1050, %v1362, 0.0
      %v1439 = vsel %vm1051, %v1363, 0.0
      %v1440 = vsel %vm1052, %v1364, 0.0
      %v1441 = vsel %vm1053, %v1365, 0.0
      %v1442 = vsel %vm1054, %v1362, 0.0
      %v1443 = vsel %vm1055, %v1363, 0.0
      %v1444 = vsel %vm1056, %v1364, 0.0
      %v1445 = vsel %vm1057, %v1365, 0.0
      %v1446 = vsel %vm1058, %v1362, 0.0
      %v1447 = vsel %vm1059, %v1363, 0.0
      %v1448 = vsel %vm1060, %v1364, 0.0
      %v1449 = vsel %vm1061, %v1365, 0.0
      %v1450 = vsel %vm1062, %v1362, 0.0
      %v1451 = vsel %vm1063, %v1363, 0.0
      %v1452 = vsel %vm1064, %v1364, 0.0
      %v1453 = vsel %vm1065, %v1365, 0.0
      %v1454 = vsel %vm1066, %v1362, 0.0
      %v1455 = vsel %vm1067, %v1363, 0.0
      %v1456 = vsel %vm1068, %v1364, 0.0
      %v1457 = vsel %vm1069, %v1365, 0.0
      %v1458 = vsel %vm1070, %v1362, 0.0
      %v1459 = vsel %vm1071, %v1363, 0.0
      %v1460 = vsel %vm1072, %v1364, 0.0
      %v1461 = vsel %vm1073, %v1365, 0.0
      %v1462 = vsel %vm1074, %v1362, 0.0
      %v1463 = vsel %vm1075, %v1363, 0.0
      %v1464 = vsel %vm1076, %v1364, 0.0
      %v1465 = vsel %vm1077, %v1365, 0.0
      %v1466 = vsel %vm1078, %v1362, 0.0
      %v1467 = vsel %vm1079, %v1363, 0.0
      %v1468 = vsel %vm1080, %v1364, 0.0
      %v1469 = vsel %vm1081, %v1365, 0.0
      %v1470 = vsel %vm1082, %v1362, 0.0
      %v1471 = vsel %vm1083, %v1363, 0.0
      %v1472 = vsel %vm1084, %v1364, 0.0
      %v1473 = vsel %vm1085, %v1365, 0.0
      %v1474 = vsel %vm1086, %v1362, 0.0
      %v1475 = vsel %vm1087, %v1363, 0.0
      %v1476 = vsel %vm1088, %v1364, 0.0
      %v1477 = vsel %vm1089, %v1365, 0.0
      %v1478 = vsel %vm1090, %v1362, 0.0
      %v1479 = vsel %vm1091, %v1363, 0.0
      %v1480 = vsel %vm1092, %v1364, 0.0
      %v1481 = vsel %vm1093, %v1365, 0.0
      %v1482 = vsel %vm1094, %v1362, 0.0
      %v1483 = vsel %vm1095, %v1363, 0.0
      %v1484 = vsel %vm1096, %v1364, 0.0
      %v1485 = vsel %vm1097, %v1365, 0.0
      %v1486 = vsel %vm1098, %v1362, 0.0
      %v1487 = vsel %vm1099, %v1363, 0.0
      %v1488 = vsel %vm1100, %v1364, 0.0
      %v1489 = vsel %vm1101, %v1365, 0.0
      %v1490 = vsel %vm1102, %v1362, 0.0
      %v1491 = vsel %vm1103, %v1363, 0.0
      %v1492 = vsel %vm1104, %v1364, 0.0
      %v1493 = vsel %vm1105, %v1365, 0.0
      %v1494 = vsel %vm1106, %v1362, 0.0
      %v1495 = vsel %vm1107, %v1363, 0.0
      %v1496 = vsel %vm1108, %v1364, 0.0
      %v1497 = vsel %vm1109, %v1365, 0.0
      %v1498 = vsel %vm1110, %v1362, 0.0
      %v1499 = vsel %vm1111, %v1363, 0.0
      %v1500 = vsel %vm1112, %v1364, 0.0
      %v1501 = vsel %vm1113, %v1365, 0.0
      %v1502 = vsel %vm1114, %v1362, 0.0
      %v1503 = vsel %vm1115, %v1363, 0.0
      %v1504 = vsel %vm1116, %v1364, 0.0
      %v1505 = vsel %vm1117, %v1365, 0.0
      %v1506 = vsel %vm1118, %v1362, 0.0
      %v1507 = vsel %vm1119, %v1363, 0.0
      %v1508 = vsel %vm1120, %v1364, 0.0
      %v1509 = vsel %vm1121, %v1365, 0.0
      %v1510 = vsel %vm1122, %v1362, 0.0
      %v1511 = vsel %vm1123, %v1363, 0.0
      %v1512 = vsel %vm1124, %v1364, 0.0
      %v1513 = vsel %vm1125, %v1365, 0.0
      %v1514 = vsel %vm1126, %v1362, 0.0
      %v1515 = vsel %vm1127, %v1363, 0.0
      %v1516 = vsel %vm1128, %v1364, 0.0
      %v1517 = vsel %vm1129, %v1365, 0.0
      %v1518 = vsel %vm1130, %v1362, 0.0
      %v1519 = vsel %vm1131, %v1363, 0.0
      %v1520 = vsel %vm1132, %v1364, 0.0
      %v1521 = vsel %vm1133, %v1365, 0.0
      %v1522 = vsel %vm1134, %v1362, 0.0
      %v1523 = vsel %vm1135, %v1363, 0.0
      %v1524 = vsel %vm1136, %v1364, 0.0
      %v1525 = vsel %vm1137, %v1365, 0.0
      %v1526 = vsel %vm1138, %v1362, 0.0
      %v1527 = vsel %vm1139, %v1363, 0.0
      %v1528 = vsel %vm1140, %v1364, 0.0
      %v1529 = vsel %vm1141, %v1365, 0.0
      %v1530 = vsel %vm1142, %v1362, 0.0
      %v1531 = vsel %vm1143, %v1363, 0.0
      %v1532 = vsel %vm1144, %v1364, 0.0
      %v1533 = vsel %vm1145, %v1365, 0.0
      %v1534 = vsel %vm1146, %v1362, 0.0
      %v1535 = vsel %vm1147, %v1363, 0.0
      %v1536 = vsel %vm1148, %v1364, 0.0
      %v1537 = vsel %vm1149, %v1365, 0.0
      %v1538 = vsel %vm1150, %v1362, 0.0
      %v1539 = vsel %vm1151, %v1363, 0.0
      %v1540 = vsel %vm1152, %v1364, 0.0
      %v1541 = vsel %vm1153, %v1365, 0.0
      %v1542 = vsel %vm1154, %v1362, 0.0
      %v1543 = vsel %vm1155, %v1363, 0.0
      %v1544 = vsel %vm1156, %v1364, 0.0
      %v1545 = vsel %vm1157, %v1365, 0.0
      %v1546 = vsel %vm1158, %v1362, 0.0
      %v1547 = vsel %vm1159, %v1363, 0.0
      %v1548 = vsel %vm1160, %v1364, 0.0
      %v1549 = vsel %vm1161, %v1365, 0.0
      %v1550 = vsel %vm1162, %v1362, 0.0
      %v1551 = vsel %vm1163, %v1363, 0.0
      %v1552 = vsel %vm1164, %v1364, 0.0
      %v1553 = vsel %vm1165, %v1365, 0.0
      %v1554 = vsel %vm1166, %v1362, 0.0
      %v1555 = vsel %vm1167, %v1363, 0.0
      %v1556 = vsel %vm1168, %v1364, 0.0
      %v1557 = vsel %vm1169, %v1365, 0.0
      %v1558 = vsel %vm1170, %v1362, 0.0
      %v1559 = vsel %vm1171, %v1363, 0.0
      %v1560 = vsel %vm1172, %v1364, 0.0
      %v1561 = vsel %vm1173, %v1365, 0.0
      %v1562 = vsel %vm1174, %v1362, 0.0
      %v1563 = vsel %vm1175, %v1363, 0.0
      %v1564 = vsel %vm1176, %v1364, 0.0
      %v1565 = vsel %vm1177, %v1365, 0.0
      %v1566 = vsel %vm1178, %v1362, 0.0
      %v1567 = vsel %vm1179, %v1363, 0.0
      %v1568 = vsel %vm1180, %v1364, 0.0
      %v1569 = vsel %vm1181, %v1365, 0.0
      %v1570 = vsel %vm1182, %v1362, 0.0
      %v1571 = vsel %vm1183, %v1363, 0.0
      %v1572 = vsel %vm1184, %v1364, 0.0
      %v1573 = vsel %vm1185, %v1365, 0.0
      %v1574 = vsel %vm1186, %v1362, 0.0
      %v1575 = vsel %vm1187, %v1363, 0.0
      %v1576 = vsel %vm1188, %v1364, 0.0
      %v1577 = vsel %vm1189, %v1365, 0.0
      %v1578 = vsel %vm1190, %v1362, 0.0
      %v1579 = vsel %vm1191, %v1363, 0.0
      %v1580 = vsel %vm1192, %v1364, 0.0
      %v1581 = vsel %vm1193, %v1365, 0.0
      %v1582 = vsel %vm1194, %v1362, 0.0
      %v1583 = vsel %vm1195, %v1363, 0.0
      %v1584 = vsel %vm1196, %v1364, 0.0
      %v1585 = vsel %vm1197, %v1365, 0.0
      %v1586 = vsel %vm1198, %v1362, 0.0
      %v1587 = vsel %vm1199, %v1363, 0.0
      %v1588 = vsel %vm1200, %v1364, 0.0
      %v1589 = vsel %vm1201, %v1365, 0.0
      %v1590 = vsel %vm1202, %v1362, 0.0
      %v1591 = vsel %vm1203, %v1363, 0.0
      %v1592 = vsel %vm1204, %v1364, 0.0
      %v1593 = vsel %vm1205, %v1365, 0.0
      %v1594 = vsel %vm1206, %v1362, 0.0
      %v1595 = vsel %vm1207, %v1363, 0.0
      %v1596 = vsel %vm1208, %v1364, 0.0
      %v1597 = vsel %vm1209, %v1365, 0.0
      %v1598 = vsel %vm1210, %v1362, 0.0
      %v1599 = vsel %vm1211, %v1363, 0.0
      %v1600 = vsel %vm1212, %v1364, 0.0
      %v1601 = vsel %vm1213, %v1365, 0.0
      %v1602 = vsel %vm1214, %v1362, 0.0
      %v1603 = vsel %vm1215, %v1363, 0.0
      %v1604 = vsel %vm1216, %v1364, 0.0
      %v1605 = vsel %vm1217, %v1365, 0.0
      %v1606 = vsel %vm1218, %v1362, 0.0
      %v1607 = vsel %vm1219, %v1363, 0.0
      %v1608 = vsel %vm1220, %v1364, 0.0
      %v1609 = vsel %vm1221, %v1365, 0.0
      %v1610 = vsel %vm1222, %v1362, 0.0
      %v1611 = vsel %vm1223, %v1363, 0.0
      %v1612 = vsel %vm1224, %v1364, 0.0
      %v1613 = vsel %vm1225, %v1365, 0.0
      %v1614 = vsel %vm1226, %v1362, 0.0
      %v1615 = vsel %vm1227, %v1363, 0.0
      %v1616 = vsel %vm1228, %v1364, 0.0
      %v1617 = vsel %vm1229, %v1365, 0.0
      %v1618 = vsel %vm1230, %v1362, 0.0
      %v1619 = vsel %vm1231, %v1363, 0.0
      %v1620 = vsel %vm1232, %v1364, 0.0
      %v1621 = vsel %vm1233, %v1365, 0.0
      %v1622 = vsel %vm1234, %v1362, 0.0
      %v1623 = vsel %vm1235, %v1363, 0.0
      %v1624 = vsel %vm1236, %v1364, 0.0
      %v1625 = vsel %vm1237, %v1365, 0.0
      %v1626 = vsel %vm1238, %v1362, 0.0
      %v1627 = vsel %vm1239, %v1363, 0.0
      %v1628 = vsel %vm1240, %v1364, 0.0
      %v1629 = vsel %vm1241, %v1365, 0.0
      %v1630 = vsel %vm1242, %v1362, 0.0
      %v1631 = vsel %vm1243, %v1363, 0.0
      %v1632 = vsel %vm1244, %v1364, 0.0
      %v1633 = vsel %vm1245, %v1365, 0.0
      %v1634 = vsel %vm1246, %v1362, 0.0
      %v1635 = vsel %vm1247, %v1363, 0.0
      %v1636 = vsel %vm1248, %v1364, 0.0
      %v1637 = vsel %vm1249, %v1365, 0.0
      %v1638 = vsel %vm1250, %v1362, 0.0
      %v1639 = vsel %vm1251, %v1363, 0.0
      %v1640 = vsel %vm1252, %v1364, 0.0
      %v1641 = vsel %vm1253, %v1365, 0.0
      %v1642 = vsel %vm1254, %v1362, 0.0
      %v1643 = vsel %vm1255, %v1363, 0.0
      %v1644 = vsel %vm1256, %v1364, 0.0
      %v1645 = vsel %vm1257, %v1365, 0.0
      %v1646 = vsel %vm1258, %v1362, 0.0
      %v1647 = vsel %vm1259, %v1363, 0.0
      %v1648 = vsel %vm1260, %v1364, 0.0
      %v1649 = vsel %vm1261, %v1365, 0.0
      %v1650 = vsel %vm1262, %v1362, 0.0
      %v1651 = vsel %vm1263, %v1363, 0.0
      %v1652 = vsel %vm1264, %v1364, 0.0
      %v1653 = vsel %vm1265, %v1365, 0.0
      %v1654 = vsel %vm1266, %v1362, 0.0
      %v1655 = vsel %vm1267, %v1363, 0.0
      %v1656 = vsel %vm1268, %v1364, 0.0
      %v1657 = vsel %vm1269, %v1365, 0.0
      %v1658 = vsel %vm1270, %v1362, 0.0
      %v1659 = vsel %vm1271, %v1363, 0.0
      %v1660 = vsel %vm1272, %v1364, 0.0
      %v1661 = vsel %vm1273, %v1365, 0.0
      %v1662 = vsel %vm1274, %v1362, 0.0
      %v1663 = vsel %vm1275, %v1363, 0.0
      %v1664 = vsel %vm1276, %v1364, 0.0
      %v1665 = vsel %vm1277, %v1365, 0.0
      %v1666 = vsel %vm1278, %v1362, 0.0
      %v1667 = vsel %vm1279, %v1363, 0.0
      %v1668 = vsel %vm1280, %v1364, 0.0
      %v1669 = vsel %vm1281, %v1365, 0.0
      %v1670 = vsel %vm1282, %v1362, 0.0
      %v1671 = vsel %vm1283, %v1363, 0.0
      %v1672 = vsel %vm1284, %v1364, 0.0
      %v1673 = vsel %vm1285, %v1365, 0.0
      %v1674 = vsel %vm1286, %v1362, 0.0
      %v1675 = vsel %vm1287, %v1363, 0.0
      %v1676 = vsel %vm1288, %v1364, 0.0
      %v1677 = vsel %vm1289, %v1365, 0.0
      %v1678 = vsel %vm1290, %v1362, 0.0
      %v1679 = vsel %vm1291, %v1363, 0.0
      %v1680 = vsel %vm1292, %v1364, 0.0
      %v1681 = vsel %vm1293, %v1365, 0.0
      %v1682 = vsel %vm1294, %v1362, 0.0
      %v1683 = vsel %vm1295, %v1363, 0.0
      %v1684 = vsel %vm1296, %v1364, 0.0
      %v1685 = vsel %vm1297, %v1365, 0.0
      %v1686 = vsel %vm1298, %v1362, 0.0
      %v1687 = vsel %vm1299, %v1363, 0.0
      %v1688 = vsel %vm1300, %v1364, 0.0
      %v1689 = vsel %vm1301, %v1365, 0.0
      %v1690 = vsel %vm1302, %v1362, 0.0
      %v1691 = vsel %vm1303, %v1363, 0.0
      %v1692 = vsel %vm1304, %v1364, 0.0
      %v1693 = vsel %vm1305, %v1365, 0.0
      %v1694 = vsel %vm1306, %v1362, 0.0
      %v1695 = vsel %vm1307, %v1363, 0.0
      %v1696 = vsel %vm1308, %v1364, 0.0
      %v1697 = vsel %vm1309, %v1365, 0.0
      %v1698 = vsel %vm1310, %v1362, 0.0
      %v1699 = vsel %vm1311, %v1363, 0.0
      %v1700 = vsel %vm1312, %v1364, 0.0
      %v1701 = vsel %vm1313, %v1365, 0.0
      %v1702 = vsel %vm1314, %v1362, 0.0
      %v1703 = vsel %vm1315, %v1363, 0.0
      %v1704 = vsel %vm1316, %v1364, 0.0
      %v1705 = vsel %vm1317, %v1365, 0.0
      %v1706 = vsel %vm1318, %v1362, 0.0
      %v1707 = vsel %vm1319, %v1363, 0.0
      %v1708 = vsel %vm1320, %v1364, 0.0
      %v1709 = vsel %vm1321, %v1365, 0.0
      %v1710 = vsel %vm1322, %v1362, 0.0
      %v1711 = vsel %vm1323, %v1363, 0.0
      %v1712 = vsel %vm1324, %v1364, 0.0
      %v1713 = vsel %vm1325, %v1365, 0.0
      %v1714 = vsel %vm1326, %v1362, 0.0
      %v1715 = vsel %vm1327, %v1363, 0.0
      %v1716 = vsel %vm1328, %v1364, 0.0
      %v1717 = vsel %vm1329, %v1365, 0.0
      %v1718 = vsel %vm1330, %v1362, 0.0
      %v1719 = vsel %vm1331, %v1363, 0.0
      %v1720 = vsel %vm1332, %v1364, 0.0
      %v1721 = vsel %vm1333, %v1365, 0.0
      %v1722 = vsel %vm1334, %v1362, 0.0
      %v1723 = vsel %vm1335, %v1363, 0.0
      %v1724 = vsel %vm1336, %v1364, 0.0
      %v1725 = vsel %vm1337, %v1365, 0.0
      %v1726 = vsel %vm1338, %v1362, 0.0
      %v1727 = vsel %vm1339, %v1363, 0.0
      %v1728 = vsel %vm1340, %v1364, 0.0
      %v1729 = vsel %vm1341, %v1365, 0.0
      %v1730 = vsel %vm1342, %v1362, 0.0
      %v1731 = vsel %vm1343, %v1363, 0.0
      %v1732 = vsel %vm1344, %v1364, 0.0
      %v1733 = vsel %vm1345, %v1365, 0.0
      %v1734 = vsel %vm1346, %v1362, 0.0
      %v1735 = vsel %vm1347, %v1363, 0.0
      %v1736 = vsel %vm1348, %v1364, 0.0
      %v1737 = vsel %vm1349, %v1365, 0.0
      %v1738 = vsel %vm1350, %v1362, 0.0
      %v1739 = vsel %vm1351, %v1363, 0.0
      %v1740 = vsel %vm1352, %v1364, 0.0
      %v1741 = vsel %vm1353, %v1365, 0.0
      %v1742 = vsel %vm1354, %v1362, 0.0
      %v1743 = vsel %vm1355, %v1363, 0.0
      %v1744 = vsel %vm1356, %v1364, 0.0
      %v1745 = vsel %vm1357, %v1365, 0.0
      %v1746 = vsel %vm1358, %v1362, 0.0
      %v1747 = vsel %vm1359, %v1363, 0.0
      %v1748 = vsel %vm1360, %v1364, 0.0
      %v1749 = vsel %vm1361, %v1365, 0.0
      %v1750 = vperm.slane %v194, 1
      %v1751 = vperm.slane %v195, 1
      %v1752 = vperm.slane %v196, 1
      %v1753 = vperm.slane %v197, 1
      %v1754 = vsel %vm586, %v1750, %v1366
      %v1755 = vsel %vm587, %v1751, %v1367
      %v1756 = vsel %vm588, %v1752, %v1368
      %v1757 = vsel %vm589, %v1753, %v1369
      %v1758 = vsel %vm590, %v1750, %v1370
      %v1759 = vsel %vm591, %v1751, %v1371
      %v1760 = vsel %vm592, %v1752, %v1372
      %v1761 = vsel %vm593, %v1753, %v1373
      %v1762 = vsel %vm594, %v1750, %v1374
      %v1763 = vsel %vm595, %v1751, %v1375
      %v1764 = vsel %vm596, %v1752, %v1376
      %v1765 = vsel %vm597, %v1753, %v1377
      %v1766 = vsel %vm598, %v1750, %v1378
      %v1767 = vsel %vm599, %v1751, %v1379
      %v1768 = vsel %vm600, %v1752, %v1380
      %v1769 = vsel %vm601, %v1753, %v1381
      %v1770 = vsel %vm602, %v1750, %v1382
      %v1771 = vsel %vm603, %v1751, %v1383
      %v1772 = vsel %vm604, %v1752, %v1384
      %v1773 = vsel %vm605, %v1753, %v1385
      %v1774 = vsel %vm606, %v1750, %v1386
      %v1775 = vsel %vm607, %v1751, %v1387
      %v1776 = vsel %vm608, %v1752, %v1388
      %v1777 = vsel %vm609, %v1753, %v1389
      %v1778 = vsel %vm610, %v1750, %v1390
      %v1779 = vsel %vm611, %v1751, %v1391
      %v1780 = vsel %vm612, %v1752, %v1392
      %v1781 = vsel %vm613, %v1753, %v1393
      %v1782 = vsel %vm614, %v1750, %v1394
      %v1783 = vsel %vm615, %v1751, %v1395
      %v1784 = vsel %vm616, %v1752, %v1396
      %v1785 = vsel %vm617, %v1753, %v1397
      %v1786 = vsel %vm618, %v1750, %v1398
      %v1787 = vsel %vm619, %v1751, %v1399
      %v1788 = vsel %vm620, %v1752, %v1400
      %v1789 = vsel %vm621, %v1753, %v1401
      %v1790 = vsel %vm622, %v1750, %v1402
      %v1791 = vsel %vm623, %v1751, %v1403
      %v1792 = vsel %vm624, %v1752, %v1404
      %v1793 = vsel %vm625, %v1753, %v1405
      %v1794 = vsel %vm626, %v1750, %v1406
      %v1795 = vsel %vm627, %v1751, %v1407
      %v1796 = vsel %vm628, %v1752, %v1408
      %v1797 = vsel %vm629, %v1753, %v1409
      %v1798 = vsel %vm630, %v1750, %v1410
      %v1799 = vsel %vm631, %v1751, %v1411
      %v1800 = vsel %vm632, %v1752, %v1412
      %v1801 = vsel %vm633, %v1753, %v1413
      %v1802 = vsel %vm634, %v1750, %v1414
      %v1803 = vsel %vm635, %v1751, %v1415
      %v1804 = vsel %vm636, %v1752, %v1416
      %v1805 = vsel %vm637, %v1753, %v1417
      %v1806 = vsel %vm638, %v1750, %v1418
      %v1807 = vsel %vm639, %v1751, %v1419
      %v1808 = vsel %vm640, %v1752, %v1420
      %v1809 = vsel %vm641, %v1753, %v1421
      %v1810 = vsel %vm642, %v1750, %v1422
      %v1811 = vsel %vm643, %v1751, %v1423
      %v1812 = vsel %vm644, %v1752, %v1424
      %v1813 = vsel %vm645, %v1753, %v1425
      %v1814 = vsel %vm646, %v1750, %v1426
      %v1815 = vsel %vm647, %v1751, %v1427
      %v1816 = vsel %vm648, %v1752, %v1428
      %v1817 = vsel %vm649, %v1753, %v1429
      %v1818 = vsel %vm650, %v1750, %v1430
      %v1819 = vsel %vm651, %v1751, %v1431
      %v1820 = vsel %vm652, %v1752, %v1432
      %v1821 = vsel %vm653, %v1753, %v1433
      %v1822 = vsel %vm654, %v1750, %v1434
      %v1823 = vsel %vm655, %v1751, %v1435
      %v1824 = vsel %vm656, %v1752, %v1436
      %v1825 = vsel %vm657, %v1753, %v1437
      %v1826 = vsel %vm658, %v1750, %v1438
      %v1827 = vsel %vm659, %v1751, %v1439
      %v1828 = vsel %vm660, %v1752, %v1440
      %v1829 = vsel %vm661, %v1753, %v1441
      %v1830 = vsel %vm662, %v1750, %v1442
      %v1831 = vsel %vm663, %v1751, %v1443
      %v1832 = vsel %vm664, %v1752, %v1444
      %v1833 = vsel %vm665, %v1753, %v1445
      %v1834 = vsel %vm666, %v1750, %v1446
      %v1835 = vsel %vm667, %v1751, %v1447
      %v1836 = vsel %vm668, %v1752, %v1448
      %v1837 = vsel %vm669, %v1753, %v1449
      %v1838 = vsel %vm670, %v1750, %v1450
      %v1839 = vsel %vm671, %v1751, %v1451
      %v1840 = vsel %vm672, %v1752, %v1452
      %v1841 = vsel %vm673, %v1753, %v1453
      %v1842 = vsel %vm674, %v1750, %v1454
      %v1843 = vsel %vm675, %v1751, %v1455
      %v1844 = vsel %vm676, %v1752, %v1456
      %v1845 = vsel %vm677, %v1753, %v1457
      %v1846 = vsel %vm678, %v1750, %v1458
      %v1847 = vsel %vm679, %v1751, %v1459
      %v1848 = vsel %vm680, %v1752, %v1460
      %v1849 = vsel %vm681, %v1753, %v1461
      %v1850 = vsel %vm682, %v1750, %v1462
      %v1851 = vsel %vm683, %v1751, %v1463
      %v1852 = vsel %vm684, %v1752, %v1464
      %v1853 = vsel %vm685, %v1753, %v1465
      %v1854 = vsel %vm686, %v1750, %v1466
      %v1855 = vsel %vm687, %v1751, %v1467
      %v1856 = vsel %vm688, %v1752, %v1468
      %v1857 = vsel %vm689, %v1753, %v1469
      %v1858 = vsel %vm690, %v1750, %v1470
      %v1859 = vsel %vm691, %v1751, %v1471
      %v1860 = vsel %vm692, %v1752, %v1472
      %v1861 = vsel %vm693, %v1753, %v1473
      %v1862 = vsel %vm694, %v1750, %v1474
      %v1863 = vsel %vm695, %v1751, %v1475
      %v1864 = vsel %vm696, %v1752, %v1476
      %v1865 = vsel %vm697, %v1753, %v1477
      %v1866 = vsel %vm698, %v1750, %v1478
      %v1867 = vsel %vm699, %v1751, %v1479
      %v1868 = vsel %vm700, %v1752, %v1480
      %v1869 = vsel %vm701, %v1753, %v1481
      %v1870 = vsel %vm702, %v1750, %v1482
      %v1871 = vsel %vm703, %v1751, %v1483
      %v1872 = vsel %vm704, %v1752, %v1484
      %v1873 = vsel %vm705, %v1753, %v1485
      %v1874 = vsel %vm706, %v1750, %v1486
      %v1875 = vsel %vm707, %v1751, %v1487
      %v1876 = vsel %vm708, %v1752, %v1488
      %v1877 = vsel %vm709, %v1753, %v1489
      %v1878 = vsel %vm710, %v1750, %v1490
      %v1879 = vsel %vm711, %v1751, %v1491
      %v1880 = vsel %vm712, %v1752, %v1492
      %v1881 = vsel %vm713, %v1753, %v1493
      %v1882 = vsel %vm714, %v1750, %v1494
      %v1883 = vsel %vm715, %v1751, %v1495
      %v1884 = vsel %vm716, %v1752, %v1496
      %v1885 = vsel %vm717, %v1753, %v1497
      %v1886 = vsel %vm718, %v1750, %v1498
      %v1887 = vsel %vm719, %v1751, %v1499
      %v1888 = vsel %vm720, %v1752, %v1500
      %v1889 = vsel %vm721, %v1753, %v1501
      %v1890 = vsel %vm722, %v1750, %v1502
      %v1891 = vsel %vm723, %v1751, %v1503
      %v1892 = vsel %vm724, %v1752, %v1504
      %v1893 = vsel %vm725, %v1753, %v1505
      %v1894 = vsel %vm726, %v1750, %v1506
      %v1895 = vsel %vm727, %v1751, %v1507
      %v1896 = vsel %vm728, %v1752, %v1508
      %v1897 = vsel %vm729, %v1753, %v1509
      %v1898 = vsel %vm730, %v1750, %v1510
      %v1899 = vsel %vm731, %v1751, %v1511
      %v1900 = vsel %vm732, %v1752, %v1512
      %v1901 = vsel %vm733, %v1753, %v1513
      %v1902 = vsel %vm734, %v1750, %v1514
      %v1903 = vsel %vm735, %v1751, %v1515
      %v1904 = vsel %vm736, %v1752, %v1516
      %v1905 = vsel %vm737, %v1753, %v1517
      %v1906 = vsel %vm738, %v1750, %v1518
      %v1907 = vsel %vm739, %v1751, %v1519
      %v1908 = vsel %vm740, %v1752, %v1520
      %v1909 = vsel %vm741, %v1753, %v1521
      %v1910 = vsel %vm742, %v1750, %v1522
      %v1911 = vsel %vm743, %v1751, %v1523
      %v1912 = vsel %vm744, %v1752, %v1524
      %v1913 = vsel %vm745, %v1753, %v1525
      %v1914 = vsel %vm746, %v1750, %v1526
      %v1915 = vsel %vm747, %v1751, %v1527
      %v1916 = vsel %vm748, %v1752, %v1528
      %v1917 = vsel %vm749, %v1753, %v1529
      %v1918 = vsel %vm750, %v1750, %v1530
      %v1919 = vsel %vm751, %v1751, %v1531
      %v1920 = vsel %vm752, %v1752, %v1532
      %v1921 = vsel %vm753, %v1753, %v1533
      %v1922 = vsel %vm754, %v1750, %v1534
      %v1923 = vsel %vm755, %v1751, %v1535
      %v1924 = vsel %vm756, %v1752, %v1536
      %v1925 = vsel %vm757, %v1753, %v1537
      %v1926 = vsel %vm758, %v1750, %v1538
      %v1927 = vsel %vm759, %v1751, %v1539
      %v1928 = vsel %vm760, %v1752, %v1540
      %v1929 = vsel %vm761, %v1753, %v1541
      %v1930 = vsel %vm762, %v1750, %v1542
      %v1931 = vsel %vm763, %v1751, %v1543
      %v1932 = vsel %vm764, %v1752, %v1544
      %v1933 = vsel %vm765, %v1753, %v1545
      %v1934 = vsel %vm766, %v1750, %v1546
      %v1935 = vsel %vm767, %v1751, %v1547
      %v1936 = vsel %vm768, %v1752, %v1548
      %v1937 = vsel %vm769, %v1753, %v1549
      %v1938 = vsel %vm770, %v1750, %v1550
      %v1939 = vsel %vm771, %v1751, %v1551
      %v1940 = vsel %vm772, %v1752, %v1552
      %v1941 = vsel %vm773, %v1753, %v1553
      %v1942 = vsel %vm774, %v1750, %v1554
      %v1943 = vsel %vm775, %v1751, %v1555
      %v1944 = vsel %vm776, %v1752, %v1556
      %v1945 = vsel %vm777, %v1753, %v1557
      %v1946 = vsel %vm778, %v1750, %v1558
      %v1947 = vsel %vm779, %v1751, %v1559
      %v1948 = vsel %vm780, %v1752, %v1560
      %v1949 = vsel %vm781, %v1753, %v1561
      %v1950 = vsel %vm782, %v1750, %v1562
      %v1951 = vsel %vm783, %v1751, %v1563
      %v1952 = vsel %vm784, %v1752, %v1564
      %v1953 = vsel %vm785, %v1753, %v1565
      %v1954 = vsel %vm786, %v1750, %v1566
      %v1955 = vsel %vm787, %v1751, %v1567
      %v1956 = vsel %vm788, %v1752, %v1568
      %v1957 = vsel %vm789, %v1753, %v1569
      %v1958 = vsel %vm790, %v1750, %v1570
      %v1959 = vsel %vm791, %v1751, %v1571
      %v1960 = vsel %vm792, %v1752, %v1572
      %v1961 = vsel %vm793, %v1753, %v1573
      %v1962 = vsel %vm794, %v1750, %v1574
      %v1963 = vsel %vm795, %v1751, %v1575
      %v1964 = vsel %vm796, %v1752, %v1576
      %v1965 = vsel %vm797, %v1753, %v1577
      %v1966 = vsel %vm798, %v1750, %v1578
      %v1967 = vsel %vm799, %v1751, %v1579
      %v1968 = vsel %vm800, %v1752, %v1580
      %v1969 = vsel %vm801, %v1753, %v1581
      %v1970 = vsel %vm802, %v1750, %v1582
      %v1971 = vsel %vm803, %v1751, %v1583
      %v1972 = vsel %vm804, %v1752, %v1584
      %v1973 = vsel %vm805, %v1753, %v1585
      %v1974 = vsel %vm806, %v1750, %v1586
      %v1975 = vsel %vm807, %v1751, %v1587
      %v1976 = vsel %vm808, %v1752, %v1588
      %v1977 = vsel %vm809, %v1753, %v1589
      %v1978 = vsel %vm810, %v1750, %v1590
      %v1979 = vsel %vm811, %v1751, %v1591
      %v1980 = vsel %vm812, %v1752, %v1592
      %v1981 = vsel %vm813, %v1753, %v1593
      %v1982 = vsel %vm814, %v1750, %v1594
      %v1983 = vsel %vm815, %v1751, %v1595
      %v1984 = vsel %vm816, %v1752, %v1596
      %v1985 = vsel %vm817, %v1753, %v1597
      %v1986 = vsel %vm818, %v1750, %v1598
      %v1987 = vsel %vm819, %v1751, %v1599
      %v1988 = vsel %vm820, %v1752, %v1600
      %v1989 = vsel %vm821, %v1753, %v1601
      %v1990 = vsel %vm822, %v1750, %v1602
      %v1991 = vsel %vm823, %v1751, %v1603
      %v1992 = vsel %vm824, %v1752, %v1604
      %v1993 = vsel %vm825, %v1753, %v1605
      %v1994 = vsel %vm826, %v1750, %v1606
      %v1995 = vsel %vm827, %v1751, %v1607
      %v1996 = vsel %vm828, %v1752, %v1608
      %v1997 = vsel %vm829, %v1753, %v1609
      %v1998 = vsel %vm830, %v1750, %v1610
      %v1999 = vsel %vm831, %v1751, %v1611
      %v2000 = vsel %vm832, %v1752, %v1612
      %v2001 = vsel %vm833, %v1753, %v1613
      %v2002 = vsel %vm834, %v1750, %v1614
      %v2003 = vsel %vm835, %v1751, %v1615
      %v2004 = vsel %vm836, %v1752, %v1616
      %v2005 = vsel %vm837, %v1753, %v1617
      %v2006 = vsel %vm838, %v1750, %v1618
      %v2007 = vsel %vm839, %v1751, %v1619
      %v2008 = vsel %vm840, %v1752, %v1620
      %v2009 = vsel %vm841, %v1753, %v1621
      %v2010 = vsel %vm842, %v1750, %v1622
      %v2011 = vsel %vm843, %v1751, %v1623
      %v2012 = vsel %vm844, %v1752, %v1624
      %v2013 = vsel %vm845, %v1753, %v1625
      %v2014 = vsel %vm846, %v1750, %v1626
      %v2015 = vsel %vm847, %v1751, %v1627
      %v2016 = vsel %vm848, %v1752, %v1628
      %v2017 = vsel %vm849, %v1753, %v1629
      %v2018 = vsel %vm850, %v1750, %v1630
      %v2019 = vsel %vm851, %v1751, %v1631
      %v2020 = vsel %vm852, %v1752, %v1632
      %v2021 = vsel %vm853, %v1753, %v1633
      %v2022 = vsel %vm854, %v1750, %v1634
      %v2023 = vsel %vm855, %v1751, %v1635
      %v2024 = vsel %vm856, %v1752, %v1636
      %v2025 = vsel %vm857, %v1753, %v1637
      %v2026 = vsel %vm858, %v1750, %v1638
      %v2027 = vsel %vm859, %v1751, %v1639
      %v2028 = vsel %vm860, %v1752, %v1640
      %v2029 = vsel %vm861, %v1753, %v1641
      %v2030 = vsel %vm862, %v1750, %v1642
      %v2031 = vsel %vm863, %v1751, %v1643
      %v2032 = vsel %vm864, %v1752, %v1644
      %v2033 = vsel %vm865, %v1753, %v1645
      %v2034 = vsel %vm866, %v1750, %v1646
      %v2035 = vsel %vm867, %v1751, %v1647
      %v2036 = vsel %vm868, %v1752, %v1648
      %v2037 = vsel %vm869, %v1753, %v1649
      %v2038 = vsel %vm870, %v1750, %v1650
      %v2039 = vsel %vm871, %v1751, %v1651
      %v2040 = vsel %vm872, %v1752, %v1652
      %v2041 = vsel %vm873, %v1753, %v1653
      %v2042 = vsel %vm874, %v1750, %v1654
      %v2043 = vsel %vm875, %v1751, %v1655
      %v2044 = vsel %vm876, %v1752, %v1656
      %v2045 = vsel %vm877, %v1753, %v1657
      %v2046 = vsel %vm878, %v1750, %v1658
      %v2047 = vsel %vm879, %v1751, %v1659
      %v2048 = vsel %vm880, %v1752, %v1660
      %v2049 = vsel %vm881, %v1753, %v1661
      %v2050 = vsel %vm882, %v1750, %v1662
      %v2051 = vsel %vm883, %v1751, %v1663
      %v2052 = vsel %vm884, %v1752, %v1664
      %v2053 = vsel %vm885, %v1753, %v1665
      %v2054 = vsel %vm886, %v1750, %v1666
      %v2055 = vsel %vm887, %v1751, %v1667
      %v2056 = vsel %vm888, %v1752, %v1668
      %v2057 = vsel %vm889, %v1753, %v1669
      %v2058 = vsel %vm890, %v1750, %v1670
      %v2059 = vsel %vm891, %v1751, %v1671
      %v2060 = vsel %vm892, %v1752, %v1672
      %v2061 = vsel %vm893, %v1753, %v1673
      %v2062 = vsel %vm894, %v1750, %v1674
      %v2063 = vsel %vm895, %v1751, %v1675
      %v2064 = vsel %vm896, %v1752, %v1676
      %v2065 = vsel %vm897, %v1753, %v1677
      %v2066 = vsel %vm898, %v1750, %v1678
      %v2067 = vsel %vm899, %v1751, %v1679
      %v2068 = vsel %vm900, %v1752, %v1680
      %v2069 = vsel %vm901, %v1753, %v1681
      %v2070 = vsel %vm902, %v1750, %v1682
      %v2071 = vsel %vm903, %v1751, %v1683
      %v2072 = vsel %vm904, %v1752, %v1684
      %v2073 = vsel %vm905, %v1753, %v1685
      %v2074 = vsel %vm906, %v1750, %v1686
      %v2075 = vsel %vm907, %v1751, %v1687
      %v2076 = vsel %vm908, %v1752, %v1688
      %v2077 = vsel %vm909, %v1753, %v1689
      %v2078 = vsel %vm910, %v1750, %v1690
      %v2079 = vsel %vm911, %v1751, %v1691
      %v2080 = vsel %vm912, %v1752, %v1692
      %v2081 = vsel %vm913, %v1753, %v1693
      %v2082 = vsel %vm914, %v1750, %v1694
      %v2083 = vsel %vm915, %v1751, %v1695
      %v2084 = vsel %vm916, %v1752, %v1696
      %v2085 = vsel %vm917, %v1753, %v1697
      %v2086 = vsel %vm918, %v1750, %v1698
      %v2087 = vsel %vm919, %v1751, %v1699
      %v2088 = vsel %vm920, %v1752, %v1700
      %v2089 = vsel %vm921, %v1753, %v1701
      %v2090 = vsel %vm922, %v1750, %v1702
      %v2091 = vsel %vm923, %v1751, %v1703
      %v2092 = vsel %vm924, %v1752, %v1704
      %v2093 = vsel %vm925, %v1753, %v1705
      %v2094 = vsel %vm926, %v1750, %v1706
      %v2095 = vsel %vm927, %v1751, %v1707
      %v2096 = vsel %vm928, %v1752, %v1708
      %v2097 = vsel %vm929, %v1753, %v1709
      %v2098 = vsel %vm930, %v1750, %v1710
      %v2099 = vsel %vm931, %v1751, %v1711
      %v2100 = vsel %vm932, %v1752, %v1712
      %v2101 = vsel %vm933, %v1753, %v1713
      %v2102 = vsel %vm934, %v1750, %v1714
      %v2103 = vsel %vm935, %v1751, %v1715
      %v2104 = vsel %vm936, %v1752, %v1716
      %v2105 = vsel %vm937, %v1753, %v1717
      %v2106 = vsel %vm938, %v1750, %v1718
      %v2107 = vsel %vm939, %v1751, %v1719
      %v2108 = vsel %vm940, %v1752, %v1720
      %v2109 = vsel %vm941, %v1753, %v1721
      %v2110 = vsel %vm942, %v1750, %v1722
      %v2111 = vsel %vm943, %v1751, %v1723
      %v2112 = vsel %vm944, %v1752, %v1724
      %v2113 = vsel %vm945, %v1753, %v1725
      %v2114 = vsel %vm946, %v1750, %v1726
      %v2115 = vsel %vm947, %v1751, %v1727
      %v2116 = vsel %vm948, %v1752, %v1728
      %v2117 = vsel %vm949, %v1753, %v1729
      %v2118 = vsel %vm950, %v1750, %v1730
      %v2119 = vsel %vm951, %v1751, %v1731
      %v2120 = vsel %vm952, %v1752, %v1732
      %v2121 = vsel %vm953, %v1753, %v1733
      %v2122 = vsel %vm954, %v1750, %v1734
      %v2123 = vsel %vm955, %v1751, %v1735
      %v2124 = vsel %vm956, %v1752, %v1736
      %v2125 = vsel %vm957, %v1753, %v1737
      %v2126 = vsel %vm958, %v1750, %v1738
      %v2127 = vsel %vm959, %v1751, %v1739
      %v2128 = vsel %vm960, %v1752, %v1740
      %v2129 = vsel %vm961, %v1753, %v1741
      %v2130 = vsel %vm962, %v1750, %v1742
      %v2131 = vsel %vm963, %v1751, %v1743
      %v2132 = vsel %vm964, %v1752, %v1744
      %v2133 = vsel %vm965, %v1753, %v1745
      %v2134 = vsel %vm966, %v1750, %v1746
      %v2135 = vsel %vm967, %v1751, %v1747
      %v2136 = vsel %vm968, %v1752, %v1748
      %v2137 = vsel %vm969, %v1753, %v1749
      %2138 = vmatpush.msra.mxu0 %v1814
      %2139 = vmatpush.msra.mxu0 %v1810
      %2140 = vmatpush.msra.mxu0 %v1806
      %2141 = vmatpush.msra.mxu0 %v1802
      %2142 = vmatpush.msra.mxu0 %v1798
      %2143 = vmatpush.msra.mxu0 %v1794
      %2144 = vmatpush.msra.mxu0 %v1790
      %2145 = vmatpush.msra.mxu0 %v1786
      %2146 = vmatpush.msra.mxu0 %v1782
      %2147 = vmatpush.msra.mxu0 %v1778
      %2148 = vmatpush.msra.mxu0 %v1774
      %2149 = vmatpush.msra.mxu0 %v1770
      %2150 = vmatpush.msra.mxu0 %v1766
      %2151 = vmatpush.msra.mxu0 %v1762
      %2152 = vmatpush.msra.mxu0 %v1758
      %2153 = vmatpush.msra.mxu0 %v1754
      %2154 = vmatmul.f32.gmra.mxu0 %v188
      %v2155 = vpop.f32.mrf.mxu0
      %v2156 = vadd.f32 0.0, %v2155
      %2157 = vdwg.mxu0
      %2158 = vmatpush.msra.mxu0 %v1878
      %2159 = vmatpush.msra.mxu0 %v1874
      %2160 = vmatpush.msra.mxu0 %v1870
      %2161 = vmatpush.msra.mxu0 %v1866
      %2162 = vmatpush.msra.mxu0 %v1862
      %2163 = vmatpush.msra.mxu0 %v1858
      %2164 = vmatpush.msra.mxu0 %v1854
      %2165 = vmatpush.msra.mxu0 %v1850
      %2166 = vmatpush.msra.mxu0 %v1846
      %2167 = vmatpush.msra.mxu0 %v1842
      %2168 = vmatpush.msra.mxu0 %v1838
      %2169 = vmatpush.msra.mxu0 %v1834
      %2170 = vmatpush.msra.mxu0 %v1830
      %2171 = vmatpush.msra.mxu0 %v1826
      %2172 = vmatpush.msra.mxu0 %v1822
      %2173 = vmatpush.msra.mxu0 %v1818
      %2174 = vmatmul.f32.gmra.mxu0 %v189
      %v2175 = vpop.f32.mrf.mxu0
      %v2176 = vadd.f32 %v2156, %v2175
      %2177 = vdwg.mxu0
      %2178 = vmatpush.msra.mxu0 %v1942
      %2179 = vmatpush.msra.mxu0 %v1938
      %2180 = vmatpush.msra.mxu0 %v1934
      %2181 = vmatpush.msra.mxu0 %v1930
      %2182 = vmatpush.msra.mxu0 %v1926
      %2183 = vmatpush.msra.mxu0 %v1922
      %2184 = vmatpush.msra.mxu0 %v1918
      %2185 = vmatpush.msra.mxu0 %v1914
      %2186 = vmatpush.msra.mxu0 %v1910
      %2187 = vmatpush.msra.mxu0 %v1906
      %2188 = vmatpush.msra.mxu0 %v1902
      %2189 = vmatpush.msra.mxu0 %v1898
      %2190 = vmatpush.msra.mxu0 %v1894
      %2191 = vmatpush.msra.mxu0 %v1890
      %2192 = vmatpush.msra.mxu0 %v1886
      %2193 = vmatpush.msra.mxu0 %v1882
      %2194 = vmatmul.f32.gmra.mxu0 %v190
      %v2195 = vpop.f32.mrf.mxu0
      %v2196 = vadd.f32 %v2176, %v2195
      %2197 = vdwg.mxu0
      %2198 = vmatpush.msra.mxu0 %v2006
      %2199 = vmatpush.msra.mxu0 %v2002
      %2200 = vmatpush.msra.mxu0 %v1998
      %2201 = vmatpush.msra.mxu0 %v1994
      %2202 = vmatpush.msra.mxu0 %v1990
      %2203 = vmatpush.msra.mxu0 %v1986
      %2204 = vmatpush.msra.mxu0 %v1982
      %2205 = vmatpush.msra.mxu0 %v1978
      %2206 = vmatpush.msra.mxu0 %v1974
      %2207 = vmatpush.msra.mxu0 %v1970
      %2208 = vmatpush.msra.mxu0 %v1966
      %2209 = vmatpush.msra.mxu0 %v1962
      %2210 = vmatpush.msra.mxu0 %v1958
      %2211 = vmatpush.msra.mxu0 %v1954
      %2212 = vmatpush.msra.mxu0 %v1950
      %2213 = vmatpush.msra.mxu0 %v1946
      %2214 = vmatmul.f32.gmra.mxu0 %v191
      %v2215 = vpop.f32.mrf.mxu0
      %v2216 = vadd.f32 %v2196, %v2215
      %2217 = vdwg.mxu0
      %2218 = vmatpush.msra.mxu0 %v2070
      %2219 = vmatpush.msra.mxu0 %v2066
      %2220 = vmatpush.msra.mxu0 %v2062
      %2221 = vmatpush.msra.mxu0 %v2058
      %2222 = vmatpush.msra.mxu0 %v2054
      %2223 = vmatpush.msra.mxu0 %v2050
      %2224 = vmatpush.msra.mxu0 %v2046
      %2225 = vmatpush.msra.mxu0 %v2042
      %2226 = vmatpush.msra.mxu0 %v2038
      %2227 = vmatpush.msra.mxu0 %v2034
      %2228 = vmatpush.msra.mxu0 %v2030
      %2229 = vmatpush.msra.mxu0 %v2026
      %2230 = vmatpush.msra.mxu0 %v2022
      %2231 = vmatpush.msra.mxu0 %v2018
      %2232 = vmatpush.msra.mxu0 %v2014
      %2233 = vmatpush.msra.mxu0 %v2010
      %2234 = vmatmul.f32.gmra.mxu0 %v192
      %v2235 = vpop.f32.mrf.mxu0
      %v2236 = vadd.f32 %v2216, %v2235
      %2237 = vdwg.mxu0
      %2238 = vmatpush.msra.mxu0 %v2134
      %2239 = vmatpush.msra.mxu0 %v2130
      %2240 = vmatpush.msra.mxu0 %v2126
      %2241 = vmatpush.msra.mxu0 %v2122
      %2242 = vmatpush.msra.mxu0 %v2118
      %2243 = vmatpush.msra.mxu0 %v2114
      %2244 = vmatpush.msra.mxu0 %v2110
      %2245 = vmatpush.msra.mxu0 %v2106
      %2246 = vmatpush.msra.mxu0 %v2102
      %2247 = vmatpush.msra.mxu0 %v2098
      %2248 = vmatpush.msra.mxu0 %v2094
      %2249 = vmatpush.msra.mxu0 %v2090
      %2250 = vmatpush.msra.mxu0 %v2086
      %2251 = vmatpush.msra.mxu0 %v2082
      %2252 = vmatpush.msra.mxu0 %v2078
      %2253 = vmatpush.msra.mxu0 %v2074
      %2254 = vmatmul.f32.gmra.mxu0 %v193
      %v2255 = vpop.f32.mrf.mxu0
      %v2256 = vadd.f32 %v2236, %v2255
      %2257 = vdwg.mxu0
      %2258 = vmatpush.msra.mxu0 %v1815
      %2259 = vmatpush.msra.mxu0 %v1811
      %2260 = vmatpush.msra.mxu0 %v1807
      %2261 = vmatpush.msra.mxu0 %v1803
      %2262 = vmatpush.msra.mxu0 %v1799
      %2263 = vmatpush.msra.mxu0 %v1795
      %2264 = vmatpush.msra.mxu0 %v1791
      %2265 = vmatpush.msra.mxu0 %v1787
      %2266 = vmatpush.msra.mxu0 %v1783
      %2267 = vmatpush.msra.mxu0 %v1779
      %2268 = vmatpush.msra.mxu0 %v1775
      %2269 = vmatpush.msra.mxu0 %v1771
      %2270 = vmatpush.msra.mxu0 %v1767
      %2271 = vmatpush.msra.mxu0 %v1763
      %2272 = vmatpush.msra.mxu0 %v1759
      %2273 = vmatpush.msra.mxu0 %v1755
      %2274 = vmatmul.f32.gmra.mxu0 %v188
      %v2275 = vpop.f32.mrf.mxu0
      %v2276 = vadd.f32 0.0, %v2275
      %2277 = vdwg.mxu0
      %2278 = vmatpush.msra.mxu0 %v1879
      %2279 = vmatpush.msra.mxu0 %v1875
      %2280 = vmatpush.msra.mxu0 %v1871
      %2281 = vmatpush.msra.mxu0 %v1867
      %2282 = vmatpush.msra.mxu0 %v1863
      %2283 = vmatpush.msra.mxu0 %v1859
      %2284 = vmatpush.msra.mxu0 %v1855
      %2285 = vmatpush.msra.mxu0 %v1851
      %2286 = vmatpush.msra.mxu0 %v1847
      %2287 = vmatpush.msra.mxu0 %v1843
      %2288 = vmatpush.msra.mxu0 %v1839
      %2289 = vmatpush.msra.mxu0 %v1835
      %2290 = vmatpush.msra.mxu0 %v1831
      %2291 = vmatpush.msra.mxu0 %v1827
      %2292 = vmatpush.msra.mxu0 %v1823
      %2293 = vmatpush.msra.mxu0 %v1819
      %2294 = vmatmul.f32.gmra.mxu0 %v189
      %v2295 = vpop.f32.mrf.mxu0
      %v2296 = vadd.f32 %v2276, %v2295
      %2297 = vdwg.mxu0
      %2298 = vmatpush.msra.mxu0 %v1943
      %2299 = vmatpush.msra.mxu0 %v1939
      %2300 = vmatpush.msra.mxu0 %v1935
      %2301 = vmatpush.msra.mxu0 %v1931
      %2302 = vmatpush.msra.mxu0 %v1927
      %2303 = vmatpush.msra.mxu0 %v1923
      %2304 = vmatpush.msra.mxu0 %v1919
      %2305 = vmatpush.msra.mxu0 %v1915
      %2306 = vmatpush.msra.mxu0 %v1911
      %2307 = vmatpush.msra.mxu0 %v1907
      %2308 = vmatpush.msra.mxu0 %v1903
      %2309 = vmatpush.msra.mxu0 %v1899
      %2310 = vmatpush.msra.mxu0 %v1895
      %2311 = vmatpush.msra.mxu0 %v1891
      %2312 = vmatpush.msra.mxu0 %v1887
      %2313 = vmatpush.msra.mxu0 %v1883
      %2314 = vmatmul.f32.gmra.mxu0 %v190
      %v2315 = vpop.f32.mrf.mxu0
      %v2316 = vadd.f32 %v2296, %v2315
      %2317 = vdwg.mxu0
      %2318 = vmatpush.msra.mxu0 %v2007
      %2319 = vmatpush.msra.mxu0 %v2003
      %2320 = vmatpush.msra.mxu0 %v1999
      %2321 = vmatpush.msra.mxu0 %v1995
      %2322 = vmatpush.msra.mxu0 %v1991
      %2323 = vmatpush.msra.mxu0 %v1987
      %2324 = vmatpush.msra.mxu0 %v1983
      %2325 = vmatpush.msra.mxu0 %v1979
      %2326 = vmatpush.msra.mxu0 %v1975
      %2327 = vmatpush.msra.mxu0 %v1971
      %2328 = vmatpush.msra.mxu0 %v1967
      %2329 = vmatpush.msra.mxu0 %v1963
      %2330 = vmatpush.msra.mxu0 %v1959
      %2331 = vmatpush.msra.mxu0 %v1955
      %2332 = vmatpush.msra.mxu0 %v1951
      %2333 = vmatpush.msra.mxu0 %v1947
      %2334 = vmatmul.f32.gmra.mxu0 %v191
      %v2335 = vpop.f32.mrf.mxu0
      %v2336 = vadd.f32 %v2316, %v2335
      %2337 = vdwg.mxu0
      %2338 = vmatpush.msra.mxu0 %v2071
      %2339 = vmatpush.msra.mxu0 %v2067
      %2340 = vmatpush.msra.mxu0 %v2063
      %2341 = vmatpush.msra.mxu0 %v2059
      %2342 = vmatpush.msra.mxu0 %v2055
      %2343 = vmatpush.msra.mxu0 %v2051
      %2344 = vmatpush.msra.mxu0 %v2047
      %2345 = vmatpush.msra.mxu0 %v2043
      %2346 = vmatpush.msra.mxu0 %v2039
      %2347 = vmatpush.msra.mxu0 %v2035
      %2348 = vmatpush.msra.mxu0 %v2031
      %2349 = vmatpush.msra.mxu0 %v2027
      %2350 = vmatpush.msra.mxu0 %v2023
      %2351 = vmatpush.msra.mxu0 %v2019
      %2352 = vmatpush.msra.mxu0 %v2015
      %2353 = vmatpush.msra.mxu0 %v2011
      %2354 = vmatmul.f32.gmra.mxu0 %v192
      %v2355 = vpop.f32.mrf.mxu0
      %v2356 = vadd.f32 %v2336, %v2355
      %2357 = vdwg.mxu0
      %2358 = vmatpush.msra.mxu0 %v2135
      %2359 = vmatpush.msra.mxu0 %v2131
      %2360 = vmatpush.msra.mxu0 %v2127
      %2361 = vmatpush.msra.mxu0 %v2123
      %2362 = vmatpush.msra.mxu0 %v2119
      %2363 = vmatpush.msra.mxu0 %v2115
      %2364 = vmatpush.msra.mxu0 %v2111
      %2365 = vmatpush.msra.mxu0 %v2107
      %2366 = vmatpush.msra.mxu0 %v2103
      %2367 = vmatpush.msra.mxu0 %v2099
      %2368 = vmatpush.msra.mxu0 %v2095
      %2369 = vmatpush.msra.mxu0 %v2091
      %2370 = vmatpush.msra.mxu0 %v2087
      %2371 = vmatpush.msra.mxu0 %v2083
      %2372 = vmatpush.msra.mxu0 %v2079
      %2373 = vmatpush.msra.mxu0 %v2075
      %2374 = vmatmul.f32.gmra.mxu0 %v193
      %v2375 = vpop.f32.mrf.mxu0
      %v2376 = vadd.f32 %v2356, %v2375
      %2377 = vdwg.mxu0
      %2378 = vmatpush.msra.mxu0 %v1816
      %2379 = vmatpush.msra.mxu0 %v1812
      %2380 = vmatpush.msra.mxu0 %v1808
      %2381 = vmatpush.msra.mxu0 %v1804
      %2382 = vmatpush.msra.mxu0 %v1800
      %2383 = vmatpush.msra.mxu0 %v1796
      %2384 = vmatpush.msra.mxu0 %v1792
      %2385 = vmatpush.msra.mxu0 %v1788
      %2386 = vmatpush.msra.mxu0 %v1784
      %2387 = vmatpush.msra.mxu0 %v1780
      %2388 = vmatpush.msra.mxu0 %v1776
      %2389 = vmatpush.msra.mxu0 %v1772
      %2390 = vmatpush.msra.mxu0 %v1768
      %2391 = vmatpush.msra.mxu0 %v1764
      %2392 = vmatpush.msra.mxu0 %v1760
      %2393 = vmatpush.msra.mxu0 %v1756
      %2394 = vmatmul.f32.gmra.mxu0 %v188
      %v2395 = vpop.f32.mrf.mxu0
      %v2396 = vadd.f32 0.0, %v2395
      %2397 = vdwg.mxu0
      %2398 = vmatpush.msra.mxu0 %v1880
      %2399 = vmatpush.msra.mxu0 %v1876
      %2400 = vmatpush.msra.mxu0 %v1872
      %2401 = vmatpush.msra.mxu0 %v1868
      %2402 = vmatpush.msra.mxu0 %v1864
      %2403 = vmatpush.msra.mxu0 %v1860
      %2404 = vmatpush.msra.mxu0 %v1856
      %2405 = vmatpush.msra.mxu0 %v1852
      %2406 = vmatpush.msra.mxu0 %v1848
      %2407 = vmatpush.msra.mxu0 %v1844
      %2408 = vmatpush.msra.mxu0 %v1840
      %2409 = vmatpush.msra.mxu0 %v1836
      %2410 = vmatpush.msra.mxu0 %v1832
      %2411 = vmatpush.msra.mxu0 %v1828
      %2412 = vmatpush.msra.mxu0 %v1824
      %2413 = vmatpush.msra.mxu0 %v1820
      %2414 = vmatmul.f32.gmra.mxu0 %v189
      %v2415 = vpop.f32.mrf.mxu0
      %v2416 = vadd.f32 %v2396, %v2415
      %2417 = vdwg.mxu0
      %2418 = vmatpush.msra.mxu0 %v1944
      %2419 = vmatpush.msra.mxu0 %v1940
      %2420 = vmatpush.msra.mxu0 %v1936
      %2421 = vmatpush.msra.mxu0 %v1932
      %2422 = vmatpush.msra.mxu0 %v1928
      %2423 = vmatpush.msra.mxu0 %v1924
      %2424 = vmatpush.msra.mxu0 %v1920
      %2425 = vmatpush.msra.mxu0 %v1916
      %2426 = vmatpush.msra.mxu0 %v1912
      %2427 = vmatpush.msra.mxu0 %v1908
      %2428 = vmatpush.msra.mxu0 %v1904
      %2429 = vmatpush.msra.mxu0 %v1900
      %2430 = vmatpush.msra.mxu0 %v1896
      %2431 = vmatpush.msra.mxu0 %v1892
      %2432 = vmatpush.msra.mxu0 %v1888
      %2433 = vmatpush.msra.mxu0 %v1884
      %2434 = vmatmul.f32.gmra.mxu0 %v190
      %v2435 = vpop.f32.mrf.mxu0
      %v2436 = vadd.f32 %v2416, %v2435
      %2437 = vdwg.mxu0
      %2438 = vmatpush.msra.mxu0 %v2008
      %2439 = vmatpush.msra.mxu0 %v2004
      %2440 = vmatpush.msra.mxu0 %v2000
      %2441 = vmatpush.msra.mxu0 %v1996
      %2442 = vmatpush.msra.mxu0 %v1992
      %2443 = vmatpush.msra.mxu0 %v1988
      %2444 = vmatpush.msra.mxu0 %v1984
      %2445 = vmatpush.msra.mxu0 %v1980
      %2446 = vmatpush.msra.mxu0 %v1976
      %2447 = vmatpush.msra.mxu0 %v1972
      %2448 = vmatpush.msra.mxu0 %v1968
      %2449 = vmatpush.msra.mxu0 %v1964
      %2450 = vmatpush.msra.mxu0 %v1960
      %2451 = vmatpush.msra.mxu0 %v1956
      %2452 = vmatpush.msra.mxu0 %v1952
      %2453 = vmatpush.msra.mxu0 %v1948
      %2454 = vmatmul.f32.gmra.mxu0 %v191
      %v2455 = vpop.f32.mrf.mxu0
      %v2456 = vadd.f32 %v2436, %v2455
      %2457 = vdwg.mxu0
      %2458 = vmatpush.msra.mxu0 %v2072
      %2459 = vmatpush.msra.mxu0 %v2068
      %2460 = vmatpush.msra.mxu0 %v2064
      %2461 = vmatpush.msra.mxu0 %v2060
      %2462 = vmatpush.msra.mxu0 %v2056
      %2463 = vmatpush.msra.mxu0 %v2052
      %2464 = vmatpush.msra.mxu0 %v2048
      %2465 = vmatpush.msra.mxu0 %v2044
      %2466 = vmatpush.msra.mxu0 %v2040
      %2467 = vmatpush.msra.mxu0 %v2036
      %2468 = vmatpush.msra.mxu0 %v2032
      %2469 = vmatpush.msra.mxu0 %v2028
      %2470 = vmatpush.msra.mxu0 %v2024
      %2471 = vmatpush.msra.mxu0 %v2020
      %2472 = vmatpush.msra.mxu0 %v2016
      %2473 = vmatpush.msra.mxu0 %v2012
      %2474 = vmatmul.f32.gmra.mxu0 %v192
      %v2475 = vpop.f32.mrf.mxu0
      %v2476 = vadd.f32 %v2456, %v2475
      %2477 = vdwg.mxu0
      %2478 = vmatpush.msra.mxu0 %v2136
      %2479 = vmatpush.msra.mxu0 %v2132
      %2480 = vmatpush.msra.mxu0 %v2128
      %2481 = vmatpush.msra.mxu0 %v2124
      %2482 = vmatpush.msra.mxu0 %v2120
      %2483 = vmatpush.msra.mxu0 %v2116
      %2484 = vmatpush.msra.mxu0 %v2112
      %2485 = vmatpush.msra.mxu0 %v2108
      %2486 = vmatpush.msra.mxu0 %v2104
      %2487 = vmatpush.msra.mxu0 %v2100
      %2488 = vmatpush.msra.mxu0 %v2096
      %2489 = vmatpush.msra.mxu0 %v2092
      %2490 = vmatpush.msra.mxu0 %v2088
      %2491 = vmatpush.msra.mxu0 %v2084
      %2492 = vmatpush.msra.mxu0 %v2080
      %2493 = vmatpush.msra.mxu0 %v2076
      %2494 = vmatmul.f32.gmra.mxu0 %v193
      %v2495 = vpop.f32.mrf.mxu0
      %v2496 = vadd.f32 %v2476, %v2495
      %2497 = vdwg.mxu0
      %2498 = vmatpush.msra.mxu0 %v1817
      %2499 = vmatpush.msra.mxu0 %v1813
      %2500 = vmatpush.msra.mxu0 %v1809
      %2501 = vmatpush.msra.mxu0 %v1805
      %2502 = vmatpush.msra.mxu0 %v1801
      %2503 = vmatpush.msra.mxu0 %v1797
      %2504 = vmatpush.msra.mxu0 %v1793
      %2505 = vmatpush.msra.mxu0 %v1789
      %2506 = vmatpush.msra.mxu0 %v1785
      %2507 = vmatpush.msra.mxu0 %v1781
      %2508 = vmatpush.msra.mxu0 %v1777
      %2509 = vmatpush.msra.mxu0 %v1773
      %2510 = vmatpush.msra.mxu0 %v1769
      %2511 = vmatpush.msra.mxu0 %v1765
      %2512 = vmatpush.msra.mxu0 %v1761
      %2513 = vmatpush.msra.mxu0 %v1757
      %2514 = vmatmul.f32.gmra.mxu0 %v188
      %v2515 = vpop.f32.mrf.mxu0
      %v2516 = vadd.f32 0.0, %v2515
      %2517 = vdwg.mxu0
      %2518 = vmatpush.msra.mxu0 %v1881
      %2519 = vmatpush.msra.mxu0 %v1877
      %2520 = vmatpush.msra.mxu0 %v1873
      %2521 = vmatpush.msra.mxu0 %v1869
      %2522 = vmatpush.msra.mxu0 %v1865
      %2523 = vmatpush.msra.mxu0 %v1861
      %2524 = vmatpush.msra.mxu0 %v1857
      %2525 = vmatpush.msra.mxu0 %v1853
      %2526 = vmatpush.msra.mxu0 %v1849
      %2527 = vmatpush.msra.mxu0 %v1845
      %2528 = vmatpush.msra.mxu0 %v1841
      %2529 = vmatpush.msra.mxu0 %v1837
      %2530 = vmatpush.msra.mxu0 %v1833
      %2531 = vmatpush.msra.mxu0 %v1829
      %2532 = vmatpush.msra.mxu0 %v1825
      %2533 = vmatpush.msra.mxu0 %v1821
      %2534 = vmatmul.f32.gmra.mxu0 %v189
      %v2535 = vpop.f32.mrf.mxu0
      %v2536 = vadd.f32 %v2516, %v2535
      %2537 = vdwg.mxu0
      %2538 = vmatpush.msra.mxu0 %v1945
      %2539 = vmatpush.msra.mxu0 %v1941
      %2540 = vmatpush.msra.mxu0 %v1937
      %2541 = vmatpush.msra.mxu0 %v1933
      %2542 = vmatpush.msra.mxu0 %v1929
      %2543 = vmatpush.msra.mxu0 %v1925
      %2544 = vmatpush.msra.mxu0 %v1921
      %2545 = vmatpush.msra.mxu0 %v1917
      %2546 = vmatpush.msra.mxu0 %v1913
      %2547 = vmatpush.msra.mxu0 %v1909
      %2548 = vmatpush.msra.mxu0 %v1905
      %2549 = vmatpush.msra.mxu0 %v1901
      %2550 = vmatpush.msra.mxu0 %v1897
      %2551 = vmatpush.msra.mxu0 %v1893
      %2552 = vmatpush.msra.mxu0 %v1889
      %2553 = vmatpush.msra.mxu0 %v1885
      %2554 = vmatmul.f32.gmra.mxu0 %v190
      %v2555 = vpop.f32.mrf.mxu0
      %v2556 = vadd.f32 %v2536, %v2555
      %2557 = vdwg.mxu0
      %2558 = vmatpush.msra.mxu0 %v2009
      %2559 = vmatpush.msra.mxu0 %v2005
      %2560 = vmatpush.msra.mxu0 %v2001
      %2561 = vmatpush.msra.mxu0 %v1997
      %2562 = vmatpush.msra.mxu0 %v1993
      %2563 = vmatpush.msra.mxu0 %v1989
      %2564 = vmatpush.msra.mxu0 %v1985
      %2565 = vmatpush.msra.mxu0 %v1981
      %2566 = vmatpush.msra.mxu0 %v1977
      %2567 = vmatpush.msra.mxu0 %v1973
      %2568 = vmatpush.msra.mxu0 %v1969
      %2569 = vmatpush.msra.mxu0 %v1965
      %2570 = vmatpush.msra.mxu0 %v1961
      %2571 = vmatpush.msra.mxu0 %v1957
      %2572 = vmatpush.msra.mxu0 %v1953
      %2573 = vmatpush.msra.mxu0 %v1949
      %2574 = vmatmul.f32.gmra.mxu0 %v191
      %v2575 = vpop.f32.mrf.mxu0
      %v2576 = vadd.f32 %v2556, %v2575
      %2577 = vdwg.mxu0
      %2578 = vmatpush.msra.mxu0 %v2073
      %2579 = vmatpush.msra.mxu0 %v2069
      %2580 = vmatpush.msra.mxu0 %v2065
      %2581 = vmatpush.msra.mxu0 %v2061
      %2582 = vmatpush.msra.mxu0 %v2057
      %2583 = vmatpush.msra.mxu0 %v2053
      %2584 = vmatpush.msra.mxu0 %v2049
      %2585 = vmatpush.msra.mxu0 %v2045
      %2586 = vmatpush.msra.mxu0 %v2041
      %2587 = vmatpush.msra.mxu0 %v2037
      %2588 = vmatpush.msra.mxu0 %v2033
      %2589 = vmatpush.msra.mxu0 %v2029
      %2590 = vmatpush.msra.mxu0 %v2025
      %2591 = vmatpush.msra.mxu0 %v2021
      %2592 = vmatpush.msra.mxu0 %v2017
      %2593 = vmatpush.msra.mxu0 %v2013
      %2594 = vmatmul.f32.gmra.mxu0 %v192
      %v2595 = vpop.f32.mrf.mxu0
      %v2596 = vadd.f32 %v2576, %v2595
      %2597 = vdwg.mxu0
      %2598 = vmatpush.msra.mxu0 %v2137
      %2599 = vmatpush.msra.mxu0 %v2133
      %2600 = vmatpush.msra.mxu0 %v2129
      %2601 = vmatpush.msra.mxu0 %v2125
      %2602 = vmatpush.msra.mxu0 %v2121
      %2603 = vmatpush.msra.mxu0 %v2117
      %2604 = vmatpush.msra.mxu0 %v2113
      %2605 = vmatpush.msra.mxu0 %v2109
      %2606 = vmatpush.msra.mxu0 %v2105
      %2607 = vmatpush.msra.mxu0 %v2101
      %2608 = vmatpush.msra.mxu0 %v2097
      %2609 = vmatpush.msra.mxu0 %v2093
      %2610 = vmatpush.msra.mxu0 %v2089
      %2611 = vmatpush.msra.mxu0 %v2085
      %2612 = vmatpush.msra.mxu0 %v2081
      %2613 = vmatpush.msra.mxu0 %v2077
      %2614 = vmatmul.f32.gmra.mxu0 %v193
      %v2615 = vpop.f32.mrf.mxu0
      %v2616 = vadd.f32 %v2596, %v2615
      %2617 = vdwg.mxu0
      %2618 = vst [vmem:[%s181] sm:$0xff] %v2256
      %2619 = vst [vmem:[%s181 + $0x8] sm:$0xff] %v2376
      %2620 = vst [vmem:[%s181 + $0x10] sm:$0xff] %v2496
      %2621 = vst [vmem:[%s181 + $0x18] sm:$0xff] %v2616
      %s2622 = smul.u32 4, %s23
      %p2623 = scmp.lt.s32.totalorder %s2622, 15
      %s2624 = scalar_select %p2623, %s2622, 15
      %s2625 = smul.addr %s2624, 8
      %s2626 = scalar_lea.vmem %s4, %s2625
      // Predicated region
      $region33: #{time_stretch_augmentation.1} parent=31 // pred_check
        %p2627 = pneg %p109
      $region34: #{time_stretch_augmentation.1} parent=31 // pred_check_branch
        %2629 = sbr.rel (%p2627) target = $region36
      $region35: #{time_stretch_augmentation.1} parent=31 // pred_region
        %s2630 = smul.u32 4, %s23
      $region36: #{time_stretch_augmentation.1} parent=31 // pred_fallthru
        _
    $region32: #{time_stretch_augmentation.1} parent=5 // pred_fallthru
      _
    %p2631 = scmp.le.s32.totalorder 2, %s18
    // Predicated region
    $region37: #{time_stretch_augmentation.1} parent=5 // pred_check
      %p2632 = pneg %p2631
    $region38: #{time_stretch_augmentation.1} parent=5 // pred_check_branch
      %2634 = sbr.rel (%p2632) target = $region40
    $region39: #{time_stretch_augmentation.1} parent=5 // pred_region
      %s2635 = ssub.s32 %s18, 2
      // Predicated region
      $region41: #{time_stretch_augmentation.1} parent=39 // pred_check
        %p2636 = pneg %p115
      $region42: #{time_stretch_augmentation.1} parent=39 // pred_check_branch
        %2638 = sbr.rel (%p2636) target = $region44
      $region43: #{time_stretch_augmentation.1} parent=39 // pred_region
        %s2639 = smul.u32 4, %s24
        %p2640 = scmp.lt.s32.totalorder %s2639, 15
        %s2641 = scalar_select %p2640, %s2639, 15
        %s2642 = smul.addr %s2641, 8
        %s2643 = scalar_lea.vmem %s4, %s2642
      $region44: #{time_stretch_augmentation.1} parent=39 // pred_fallthru
        _
    $region40: #{time_stretch_augmentation.1} parent=5 // pred_fallthru
      _
  $region6: #{time_stretch_augmentation.1} parent=0 // loop_footer
    %s22 = sadd.s32 1, %s18
  $region7: #{time_stretch_augmentation.1} parent=0 // loop_footer_branch
    %17 = sbr.rel target = $region3
  $region8: #{time_stretch_augmentation.1} parent=0 // loop_exit
    _

</llo_original>
